<compile_context>
chip_gen: v5e
topology: v5e:2x2
jax: 0.10.0
libtpu: 0.0.40
codegen_flags: <defaults>
</compile_context>

<pallas_src>
import jax
import jax.numpy as jnp
from jax.experimental import pallas as pl
from jax.experimental.pallas import tpu as pltpu


# Slabs at or below this size are computed with plain XLA (fast path).
_SMALL_SLAB_BYTES = 2 * 1024 * 1024


# --------------------------------------------------------------------------- #
# Kernel
# --------------------------------------------------------------------------- #
def _rope_kernel(th_ref, freq_ref, out_ref):
    # th_ref:   (rb, 2)   col 0 = per-row "t" value, col 1 = per-row "h" value
    # freq_ref: (3, cb)   row 0 = tiled t-freqs, row 1 = tiled h-freqs,
    #                     row 2 = precomputed additive column term
    # out_ref:  (rb, cb)  lane-dense output tile
    t_col = th_ref[:, 0:1]        # (rb, 1)
    h_col = th_ref[:, 1:2]        # (rb, 1)
    ft = freq_ref[0:1, :]         # (1, cb)
    fh = freq_ref[1:2, :]         # (1, cb)
    wf = freq_ref[2:3, :]         # (1, cb)
    out_ref[...] = t_col * ft + h_col * fh + wf


# --------------------------------------------------------------------------- #
# Tiling / VMEM planning
# --------------------------------------------------------------------------- #
def _cdiv(a, b):
    return -(-a // b)


def _pad_up(x, m):
    return _cdiv(x, m) * m


def _vmem_budget_bytes():
    """Per-generation VMEM budget: 3/4 of physical, capped at 64 MiB.

    -> ~48 MiB on v7x (64 MiB/TC), 64 MiB on v5e/v6e (128 MiB).  Falls back to
    the v7x-safe 48 MiB if the hardware query is unavailable.
    """
    cap = 0
    try:
        cap = int(getattr(pltpu.get_tpu_info(), "vmem_capacity_bytes", 0) or 0)
    except Exception:
        cap = 0
    if cap <= 0:
        cap = 64 * 1024 * 1024
    return min(cap * 3 // 4, 64 * 1024 * 1024)


def _tile_vmem_bytes(rb, cb):
    """Double-buffered VMEM footprint for one grid step (out + th + freq),
    using (8,128)-padded VMEM layouts."""
    out_b = _pad_up(rb, 8) * _pad_up(cb, 128) * 4
    th_b = _pad_up(rb, 8) * 128 * 4            # (rb, 2) pads to (., 128)
    fr_b = 8 * _pad_up(cb, 128) * 4            # (3, cb) pads to (8, .)
    return 2 * (out_b + th_b + fr_b)


def _balance_block(total, blk, unit):
    """Best-effort: make the step count even (>=2 when possible) so v7x's two
    TensorCores split the writeback evenly.  Keeps blk a multiple of `unit`
    or equal to `total`.  Perf-only; harmless on 1-TC chips."""
    if blk >= total:
        if total >= 2 * unit:
            return min(total, _pad_up(_cdiv(total, 2), unit))
        return total
    steps = _cdiv(total, blk)
    if steps % 2 == 1:
        blk = max(unit, _pad_up(_cdiv(total, steps + 1), unit))
    return blk


def _plan_tiles(rows, cols, budget, target_bytes=16 * 1024 * 1024):
    """Pick an output tile (rb, cb).  Exactly one axis is tiled; the other
    spans its full extent.  Returns None if no legal tiling fits `budget`."""
    avail = budget - (1 << 20)             # 1 MiB headroom
    cols_p = _pad_up(cols, 128)

    # --- preferred: tile rows (cb = cols) -> contiguous HBM writeback -------
    per_row = cols_p * 4 + 512             # output row + padded th row (1 buf)
    fixed = 8 * cols_p * 4                 # freq block (1 buf)
    rb_budget = ((avail // 2 - fixed) // per_row) // 8 * 8
    if rb_budget >= 8:
        if rows <= 8:
            return rows, cols              # single full-extent block
        rb_target = max(8, (target_bytes // max(cols * 4, 1)) // 8 * 8)
        rb = min(rows, rb_target, rb_budget)
        rb = _balance_block(rows, rb, 8)
        return rb, cols

    # --- fallback: tile columns (rb = rows) for a few very wide rows --------
    rows_p8 = _pad_up(rows, 8)
    per_col = (rows_p8 * 4 + 32) * 128     # output + freq, per 128 columns
    fixed = rows_p8 * 512                  # padded th block
    cb_budget = ((avail // 2 - fixed) // per_col) * 128
    if cb_budget >= 128 and cols >= 128:
        cb_target = max(128, (target_bytes // max(rows * 4, 1)) // 128 * 128)
        cb = min((cols // 128) * 128, cb_target, cb_budget)
        cb = _balance_block(cols, cb, 128)
        return rows, cb

    return None


# --------------------------------------------------------------------------- #
# pallas_call wrapper
# --------------------------------------------------------------------------- #
def _rope_pallas(th, freq, *, rows, cols, rb, cb, vmem_limit):
    """th:(rows,2) f32, freq:(3,cols) f32 -> (rows, cols) f32 phase slab."""
    grid = (pl.cdiv(rows, rb), pl.cdiv(cols, cb))
    cost = pl.CostEstimate(
        flops=4 * rows * cols,
        transcendentals=0,
        bytes_accessed=rows * cols * 4 + th.size * 4 + freq.size * 4,
    )
    return pl.pallas_call(
        _rope_kernel,
        out_shape=jax.ShapeDtypeStruct((rows, cols), jnp.float32),
        grid_spec=pltpu.PrefetchScalarGridSpec(
            num_scalar_prefetch=0,
            grid=grid,
            in_specs=[
                # per-row (t, h) values; re-fetched only when the row block moves
                pl.BlockSpec((rb, 2), lambda i, j: (i, 0)),
                # frequency table; constant block index along the row axis, so
                # Pallas keeps it resident (do not "fix" this).
                pl.BlockSpec((3, cb), lambda i, j: (0, j)),
            ],
            out_specs=pl.BlockSpec((rb, cb), lambda i, j: (i, j)),
        ),
        compiler_params=pltpu.CompilerParams(
            dimension_semantics=("parallel", "parallel"),
            vmem_limit_bytes=int(vmem_limit),
        ),
        cost_estimate=cost,
    )(th, freq)


# --------------------------------------------------------------------------- #
# XLA fast path (small slabs / no-legal-tiling fallback)
# --------------------------------------------------------------------------- #
def _embed_xla(t_pos, h_pos, w_pos, t_freqs, h_freqs, w_freqs):
    T, H, W = t_pos.shape[0], h_pos.shape[0], w_pos.shape[0]
    half_t = jnp.outer(t_pos, t_freqs)
    half_h = jnp.outer(h_pos, h_freqs)
    half_w = jnp.outer(w_pos, w_freqs)
    rt = jnp.broadcast_to(half_t[:, None, None, :], (T, H, W, half_t.shape[-1]))
    rh = jnp.broadcast_to(half_h[None, :, None, :], (T, H, W, half_h.shape[-1]))
    rw = jnp.broadcast_to(half_w[None, None, :, :], (T, H, W, half_w.shape[-1]))
    em = jnp.concatenate([rt, rh, rw, rt, rh, rw], axis=-1)
    D = em.shape[-1]
    return em.reshape(T * H * W, 1, 1, D).astype(jnp.float32)


# --------------------------------------------------------------------------- #
# Module
# --------------------------------------------------------------------------- #
class VideoRopePosition3DEmbPallas:
    """JAX/Pallas port of VideoPositionEmb + VideoRopePosition3DEmb (no CP)."""

    def __init__(self, *, head_dim, len_h, len_w, len_t, base_fps=24,
                 h_extrp_ratio=1.0, w_extrp_ratio=1.0, t_extrp_ratio=1.0):
        # TODO(synk): context-parallel split requires torch.distributed; not translated.
        self.cp_group = None
        self.base_fps = base_fps
        self.max_h = len_h
        self.max_w = len_w
        self.seq = jnp.arange(max(len_h, len_w, len_t), dtype=jnp.float32)

        dim = head_dim
        dim_h = dim // 6 * 2
        dim_w = dim_h
        dim_t = dim - 2 * dim_h
        assert dim == dim_h + dim_w + dim_t, f"bad dim: {dim} != {dim_h}+{dim_w}+{dim_t}"
        assert dim_h > 2 and dim_t > 2, (
            "head_dim too small: NTK exponent dim/(dim-2) would divide by zero")
        self.head_dim, self.dim_h, self.dim_w, self.dim_t = dim, dim_h, dim_w, dim_t

        self.dim_spatial_range = (
            jnp.arange(0, dim_h, 2)[: dim_h // 2].astype(jnp.float32) / dim_h)
        self.dim_temporal_range = (
            jnp.arange(0, dim_t, 2)[: dim_t // 2].astype(jnp.float32) / dim_t)

        self.h_ntk_factor = h_extrp_ratio ** (dim_h / (dim_h - 2))
        self.w_ntk_factor = w_extrp_ratio ** (dim_w / (dim_w - 2))
        self.t_ntk_factor = t_extrp_ratio ** (dim_t / (dim_t - 2))

    # ----- half-dimension frequency tables (as in the torch module) ---------
    def _half_freqs(self):
        h_theta = 10000.0 * self.h_ntk_factor
        w_theta = 10000.0 * self.w_ntk_factor
        t_theta = 10000.0 * self.t_ntk_factor
        h_freqs = 1.0 / h_theta ** self.dim_spatial_range    # (dim_h//2,)
        w_freqs = 1.0 / w_theta ** self.dim_spatial_range    # (dim_w//2,)
        t_freqs = 1.0 / t_theta ** self.dim_temporal_range   # (dim_t//2,)
        return t_freqs, h_freqs, w_freqs

    # ----- D-length vectors, zero-padded so concat == sum inside the kernel -
    def _padded_freq_vectors(self, t_freqs, h_freqs, w_freqs):
        zt = jnp.zeros_like(t_freqs)
        zh = jnp.zeros_like(h_freqs)
        zw = jnp.zeros_like(w_freqs)
        ft_half = jnp.concatenate([t_freqs, zh, zw])
        fh_half = jnp.concatenate([zt, h_freqs, zw])
        fw_half = jnp.concatenate([zt, zh, w_freqs])
        ft = jnp.concatenate([ft_half, ft_half])   # (D,)
        fh = jnp.concatenate([fh_half, fh_half])   # (D,)
        fw = jnp.concatenate([fw_half, fw_half])   # (D,)
        return ft, fh, fw

    def generate_embeddings(self, B_T_H_W_C, fps=None):
        B, T, H, W, _ = B_T_H_W_C
        assert B == 1 or T == 1, "Batch size should be 1 or T should be 1."
        assert H <= self.max_h and W <= self.max_w

        if fps is None:
            assert T == 1, "T should be 1 for image batch."
            t_pos = self.seq[:T]
        else:
            fps_arr = jnp.atleast_1d(jnp.asarray(fps, dtype=jnp.float32))
            t_pos = self.seq[:T] / fps_arr[:1] * self.base_fps   # (T,)
        h_pos = self.seq[:H]                                      # (H,)
        w_pos = self.seq[:W]                                      # (W,)

        t_freqs, h_freqs, w_freqs = self._half_freqs()
        D = self.head_dim
        S = T * H * W

        # Small-slab fast path: fixed pallas_call cost > write time.
        if S * D * 4 <= _SMALL_SLAB_BYTES:
            return _embed_xla(t_pos, h_pos, w_pos, t_freqs, h_freqs, w_freqs)

        ft, fh, fw = self._padded_freq_vectors(t_freqs, h_freqs, w_freqs)

        # ---- choose the lane-dense column grouping ----
        if (W * D) % 128 == 0 or (H * W * D) % 128 != 0:
            # layout A: rows carry (t, h), cols span (w, d).
            rows, cols = T * H, W * D
            th = jnp.stack(
                [jnp.repeat(t_pos, H), jnp.tile(h_pos, T)], axis=-1
            ).astype(jnp.float32)                                   # (T*H, 2)
            freq = jnp.stack(
                [jnp.tile(ft, W),
                 jnp.tile(fh, W),
                 (w_pos[:, None] * fw[None, :]).reshape(-1)], axis=0
            ).astype(jnp.float32)                                   # (3, W*D)
        else:
            # layout B: rows carry t, cols span (h, w, d) — keeps stores
            # lane-dense when W*D isn't a multiple of 128 but H*W*D is.
            rows, cols = T, H * W * D
            th = jnp.stack(
                [t_pos, jnp.zeros_like(t_pos)], axis=-1
            ).astype(jnp.float32)                                   # (T, 2)
            hw = (h_pos[:, None, None] * fh[None, None, :]
                  + w_pos[None, :, None] * fw[None, None, :]).reshape(-1)
            freq = jnp.stack(
                [jnp.tile(ft, H * W),
                 jnp.zeros((H * W * D,), jnp.float32),
                 hw], axis=0
            ).astype(jnp.float32)                                   # (3, H*W*D)

        budget = _vmem_budget_bytes()
        plan = _plan_tiles(rows, cols, budget)
        if plan is None:
            # TODO(synk): slab too wide for any legal VMEM tiling on this chip;
            # fall back to XLA (correct, just not a Pallas kernel).
            return _embed_xla(t_pos, h_pos, w_pos, t_freqs, h_freqs, w_freqs)
        rb, cb = plan

        emb = _rope_pallas(th, freq, rows=rows, cols=cols, rb=rb, cb=cb,
                           vmem_limit=budget)                       # (rows, cols)
        # Row-major (rows, cols) is bit-identical to (t h w) d ordering.
        return emb.reshape(S, 1, 1, D).astype(jnp.float32)

    def __call__(self, x_B_T_H_W_C, fps=None):
        # VideoPositionEmb.forward with cp_group=None.
        return self.generate_embeddings(x_B_T_H_W_C.shape, fps=fps)


# ------------------------- pure-JAX reference (mirrors the torch code) -------
def _reference(emb_mod, B_T_H_W_C, fps):
    B, T, H, W, _ = B_T_H_W_C
    h_theta = 10000.0 * emb_mod.h_ntk_factor
    w_theta = 10000.0 * emb_mod.w_ntk_factor
    t_theta = 10000.0 * emb_mod.t_ntk_factor
    h_freqs = 1.0 / h_theta ** emb_mod.dim_spatial_range
    w_freqs = 1.0 / w_theta ** emb_mod.dim_spatial_range
    t_freqs = 1.0 / t_theta ** emb_mod.dim_temporal_range
    half_h = jnp.outer(emb_mod.seq[:H], h_freqs)
    half_w = jnp.outer(emb_mod.seq[:W], w_freqs)
    if fps is None:
        half_t = jnp.outer(emb_mod.seq[:T], t_freqs)
    else:
        fps_arr = jnp.atleast_1d(jnp.asarray(fps, jnp.float32))
        half_t = jnp.outer(emb_mod.seq[:T] / fps_arr[:1] * emb_mod.base_fps, t_freqs)
    rt = jnp.broadcast_to(half_t[:, None, None, :], (T, H, W, half_t.shape[-1]))
    rh = jnp.broadcast_to(half_h[None, :, None, :], (T, H, W, half_h.shape[-1]))
    rw = jnp.broadcast_to(half_w[None, None, :, :], (T, H, W, half_w.shape[-1]))
    em = jnp.concatenate([rt, rh, rw, rt, rh, rw], axis=-1)
    return em.reshape(T * H * W, 1, 1, emb_mod.head_dim).astype(jnp.float32)


if __name__ == "__main__":
    key = jax.random.PRNGKey(0)

    # 1) Video batch, lane-dense layout A, real Pallas path (slab ~3 MiB).
    #    Also checks Python-float fps robustness.
    B, T, H, W, C = 1, 12, 16, 32, 16
    head_dim = 128
    x = jax.random.normal(key, (B, T, H, W, C), dtype=jnp.float32)
    mod = VideoRopePosition3DEmbPallas(head_dim=head_dim, len_h=H, len_w=W, len_t=T)
    out = jax.block_until_ready(mod(x, fps=24.0))
    ref = _reference(mod, x.shape, 24.0)
    assert out.shape == (T * H * W, 1, 1, head_dim), out.shape
    assert out.dtype == jnp.float32
    assert jnp.allclose(out, ref, atol=1e-6, rtol=1e-6), \
        float(jnp.max(jnp.abs(out - ref)))

    # 2) Image batch (fps=None, T=1): small-slab XLA fast path.
    B2, T2, H2, W2, C2 = 2, 1, 8, 16, 8
    x2 = jax.random.normal(key, (B2, T2, H2, W2, C2), dtype=jnp.float32)
    mod2 = VideoRopePosition3DEmbPallas(head_dim=64, len_h=H2, len_w=W2, len_t=T2)
    out2 = jax.block_until_ready(mod2(x2, fps=None))
    ref2 = _reference(mod2, x2.shape, None)
    assert out2.shape == (T2 * H2 * W2, 1, 1, 64), out2.shape
    assert jnp.allclose(out2, ref2, atol=1e-6, rtol=1e-6)

    # 3) Exercise the Pallas paths on odd shapes by disabling the fast path.
    _SMALL_SLAB_BYTES = 0

    # 3a) generic fallback (neither W*D nor H*W*D a multiple of 128).
    B3, T3, H3, W3, C3 = 1, 2, 6, 10, 4
    x3 = jax.random.normal(key, (B3, T3, H3, W3, C3), dtype=jnp.float32)
    mod3 = VideoRopePosition3DEmbPallas(head_dim=24, len_h=H3, len_w=W3, len_t=T3)
    fps3 = jnp.array([30.0], dtype=jnp.float32)
    out3 = jax.block_until_ready(mod3(x3, fps=fps3))
    ref3 = _reference(mod3, x3.shape, fps3)
    assert out3.shape == (T3 * H3 * W3, 1, 1, 24), out3.shape
    assert jnp.allclose(out3, ref3, atol=1e-6, rtol=1e-6), \
        float(jnp.max(jnp.abs(out3 - ref3)))

    # 3b) layout B (W*D % 128 != 0 but H*W*D % 128 == 0).
    B4, T4, H4, W4, C4 = 1, 8, 16, 10, 4
    x4 = jax.random.normal(key, (B4, T4, H4, W4, C4), dtype=jnp.float32)
    mod4 = VideoRopePosition3DEmbPallas(head_dim=48, len_h=H4, len_w=W4, len_t=T4)
    out4 = jax.block_until_ready(mod4(x4, fps=24.0))
    ref4 = _reference(mod4, x4.shape, 24.0)
    assert out4.shape == (T4 * H4 * W4, 1, 1, 48), out4.shape
    assert jnp.allclose(out4, ref4, atol=1e-6, rtol=1e-6), \
        float(jnp.max(jnp.abs(out4 - ref4)))

    _SMALL_SLAB_BYTES = 2 * 1024 * 1024

    print("KERNEL_OK")
</pallas_src>

<mosaic_0001>
module attributes {stable_mosaic.version = 11 : i64} {
  func.func @_rope_kernel(%arg0: i32, %arg1: i32, %arg2: memref<96x2xf32, #tpu.memory_space<vmem>>, %arg3: memref<3x4096xf32, #tpu.memory_space<vmem>>, %arg4: memref<96x4096xf32, #tpu.memory_space<vmem>>) attributes {dimension_semantics = [#tpu.dimension_semantics<parallel>, #tpu.dimension_semantics<parallel>], iteration_bounds = array<i64: 2, 1>, scalar_prefetch = 0 : i64, scratch_operands = 0 : i64, tpu.core_type = #tpu.core_type<tc>, window_params = [{transform_indices = @transform_0, window_bounds = array<i64: 96, 2>}, {transform_indices = @transform_1, window_bounds = array<i64: 3, 4096>}, {transform_indices = @transform_2, window_bounds = array<i64: 96, 4096>}]} {
    %c0 = arith.constant 0 : index
    %c0_0 = arith.constant 0 : index
    %0 = vector.load %arg2[%c0, %c0_0] : memref<96x2xf32, #tpu.memory_space<vmem>>, vector<96x1xf32>
    %c0_1 = arith.constant 0 : index
    %c1 = arith.constant 1 : index
    %1 = vector.load %arg2[%c0_1, %c1] : memref<96x2xf32, #tpu.memory_space<vmem>>, vector<96x1xf32>
    %c0_2 = arith.constant 0 : index
    %c0_3 = arith.constant 0 : index
    %2 = vector.load %arg3[%c0_2, %c0_3] : memref<3x4096xf32, #tpu.memory_space<vmem>>, vector<1x4096xf32>
    %c1_4 = arith.constant 1 : index
    %c0_5 = arith.constant 0 : index
    %3 = vector.load %arg3[%c1_4, %c0_5] : memref<3x4096xf32, #tpu.memory_space<vmem>>, vector<1x4096xf32>
    %c2 = arith.constant 2 : index
    %c0_6 = arith.constant 0 : index
    %4 = vector.load %arg3[%c2, %c0_6] : memref<3x4096xf32, #tpu.memory_space<vmem>>, vector<1x4096xf32>
    %5 = vector.broadcast %0 : vector<96x1xf32> to vector<96x4096xf32>
    %6 = vector.broadcast %2 : vector<1x4096xf32> to vector<96x4096xf32>
    %7 = arith.mulf %5, %6 : vector<96x4096xf32>
    %8 = vector.broadcast %1 : vector<96x1xf32> to vector<96x4096xf32>
    %9 = vector.broadcast %3 : vector<1x4096xf32> to vector<96x4096xf32>
    %10 = arith.mulf %8, %9 : vector<96x4096xf32>
    %11 = arith.addf %7, %10 : vector<96x4096xf32>
    %12 = vector.broadcast %4 : vector<1x4096xf32> to vector<96x4096xf32>
    %13 = arith.addf %11, %12 : vector<96x4096xf32>
    %c0_7 = arith.constant 0 : index
    %c0_8 = arith.constant 0 : index
    %14 = vector.load %arg4[%c0_7, %c0_8] : memref<96x4096xf32, #tpu.memory_space<vmem>>, vector<96x4096xf32>
    tpu.vector_store %arg4[%c0_7, %c0_8], %13 {strides = array<i32>} : memref<96x4096xf32, #tpu.memory_space<vmem>>, vector<96x4096xf32>,
    return
  }
  func.func @transform_0(%arg0: i32, %arg1: i32) -> (i32, i32) {
    %c0_i32 = arith.constant 0 : i32
    %c0_i32_0 = arith.constant 0 : i32
    return %arg0, %c0_i32 : i32, i32
  }
  func.func @transform_1(%arg0: i32, %arg1: i32) -> (i32, i32) {
    %c0_i32 = arith.constant 0 : i32
    %c0_i32_0 = arith.constant 0 : i32
    return %c0_i32, %arg1 : i32, i32
  }
  func.func @transform_2(%arg0: i32, %arg1: i32) -> (i32, i32) {
    %c0_i32 = arith.constant 0 : i32
    return %arg0, %arg1 : i32, i32
  }
}

</mosaic_0001>

<llo_original>
// kernel: tpu_custom_call.1
$region0: #{tpu_custom_call.1}
  #allocation0 [shape = 'u32[]', space=smem, size = 0x4, offset = 0x4, fixed_abs, tag = 'smem constant byte address 0x4 - core index']
  #allocation1 [shape = 'u32[72,128]{1,0:T(1,128)}', space=vmem, size = 0x9000, scoped, tag = 'internal scratch']
  %s0 = inlined_call_operand.vmem [shape: f32[192,2], index: 0, kind: input, shape index: {}]
  %s1 = inlined_call_operand.hbm [shape: f32[3,4096], index: 1, kind: input, shape index: {}]
  %s2 = inlined_call_operand.hbm [shape: f32[192,4096], index: 2, kind: output, shape index: {}]
  %s3 = sld [smem:[#allocation0]]
  $region45: #{tpu_custom_call.1} parent=0
    _
  %s5 = ssub.s32 1, %s3
  %s6 = scalar_select 0, %s5, %s3
  $region1: #{tpu_custom_call.1} parent=0
    #allocation2 [shape = 'u8[65536]{0}', space=vmem, size = 0x10000, scoped, tag = 'input window, operand 1, single buffered']
    #allocation3 [shape = 's32[2]{0}', space=sflag, size = 0x8, scoped, tag = 'scoped memory for tpu_custom_call.1']
    #allocation4 [shape = 's32[2]{0}', space=sflag, size = 0x8, scoped, tag = 'scoped memory for tpu_custom_call.1']
    #allocation5 [shape = 'u8[3145728]{0}', space=vmem, size = 0x300000, scoped, tag = 'output window, operand 0']
    %7 = vsyncpa [#allocation3], 0
    %8 = vsyncpa [#allocation4], 0
    %s9 = scalar_lea.sflag [#allocation4], 1
    %10 = vsyncpa %s9, 0
    loop: start=0, step=1, limit=4
    $region2: #{tpu_custom_call.1} parent=1 // loop_pre_header
      _
    $region3: #{tpu_custom_call.1} parent=1 // loop_header
      %s12 = sphi 0, %s16
      %p13 = scmp.ge.s32.totalorder %s12, 4
      %s19 = sphi 0, %s31
      %s20 = sphi 0, %s27
      %s21 = sphi 0, %s19
      %s22 = sphi 0, %s20
      %s23 = sphi 0, %s21
      %s24 = sphi 0, %s22
      %s34 = sphi 0, %s36
      %s37 = sphi 0, %s34
      %s38 = sphi 0, %s37
      %s54 = sphi 0, %s38
      %s60 = sphi 0, %s62
      %s63 = sphi 0, %s60
      %s64 = sphi 0, %s63
      %s80 = sphi 0, %s64
      %s88 = sphi 0, %s90
      %s91 = sphi 0, %s88
      %s92 = sphi 0, %s91
      %s108 = sphi 0, %s92
    $region4: #{tpu_custom_call.1} parent=1 // loop_header_branch
      %15 = sbr.rel (%p13) target = $region8
    $region5: #{tpu_custom_call.1} parent=1 // loop_body
      %s17 = ssub.s32 %s12, 1
      %s18 = ssub.s32 %s12, 2
      %s25 = sadd.s32 1, %s20
      %p26 = scmp.ge.s32.totalorder %s25, 1
      %s27 = scalar_select %p26, 0, %s25
      %s28 = sadd.s32 1, %s19
      %s29 = scalar_select %p26, %s28, %s19
      %p30 = scmp.ge.s32.totalorder %s29, 2
      %s31 = scalar_select %p30, 0, %s29
      %s32 = ssub.s32 %s19, %s31
      %p33 = scmp.eq.s32.totalorder %s32, 0
      %s35 = sadd.s32 %s34, 1
      %s36 = scalar_select %p33, %s34, %s35
      %p39 = pneg %p33
      %p40 = scmp.eq.s32.totalorder %s12, 1
      %p41 = por %p39, %p40
      %p42 = scmp.ne.s32.totalorder %s34, %s37
      %p43 = scmp.eq.s32.totalorder %s12, 0
      %p44 = por %p42, %p43
      %p45 = scmp.ne.s32.totalorder %s34, %s37
      %p46 = scmp.eq.s32.totalorder %s17, 1
      %p47 = por %p45, %p46
      %p48 = scmp.ne.s32.totalorder %s37, %s38
      %p49 = scmp.eq.s32.totalorder %s17, 0
      %p50 = por %p48, %p49
      %p51 = scmp.ne.s32.totalorder %s37, %s38
      %p52 = scmp.eq.s32.totalorder %s18, 1
      %p53 = por %p51, %p52
      %p55 = scmp.ne.s32.totalorder %s38, %s54
      %p56 = scmp.eq.s32.totalorder %s18, 0
      %p57 = por %p55, %p56
      %s58 = ssub.s32 %s20, %s27
      %p59 = scmp.eq.s32.totalorder %s58, 0
      %s61 = sadd.s32 %s60, 1
      %s62 = scalar_select %p59, %s60, %s61
      %p65 = pneg %p59
      %p66 = scmp.eq.s32.totalorder %s12, 1
      %p67 = por %p65, %p66
      %p68 = scmp.ne.s32.totalorder %s60, %s63
      %p69 = scmp.eq.s32.totalorder %s12, 0
      %p70 = por %p68, %p69
      %p71 = scmp.ne.s32.totalorder %s60, %s63
      %p72 = scmp.eq.s32.totalorder %s17, 1
      %p73 = por %p71, %p72
      %p74 = scmp.ne.s32.totalorder %s63, %s64
      %p75 = scmp.eq.s32.totalorder %s17, 0
      %p76 = por %p74, %p75
      %p77 = scmp.ne.s32.totalorder %s63, %s64
      %p78 = scmp.eq.s32.totalorder %s18, 1
      %p79 = por %p77, %p78
      %p81 = scmp.ne.s32.totalorder %s64, %s80
      %p82 = scmp.eq.s32.totalorder %s18, 0
      %p83 = por %p81, %p82
      %s84 = ssub.s32 %s19, %s31
      %s85 = ssub.s32 %s20, %s27
      %s86 = sor.u32 %s84, %s85
      %p87 = scmp.eq.s32.totalorder %s86, 0
      %s89 = sadd.s32 %s88, 1
      %s90 = scalar_select %p87, %s88, %s89
      %p93 = pneg %p87
      %p94 = scmp.eq.s32.totalorder %s12, 1
      %p95 = por %p93, %p94
      %p96 = scmp.ne.s32.totalorder %s88, %s91
      %p97 = scmp.eq.s32.totalorder %s12, 0
      %p98 = por %p96, %p97
      %p99 = scmp.ne.s32.totalorder %s88, %s91
      %p100 = scmp.eq.s32.totalorder %s17, 1
      %p101 = por %p99, %p100
      %p102 = scmp.ne.s32.totalorder %s91, %s92
      %p103 = scmp.eq.s32.totalorder %s17, 0
      %p104 = por %p102, %p103
      %p105 = scmp.ne.s32.totalorder %s91, %s92
      %p106 = scmp.eq.s32.totalorder %s18, 1
      %p107 = por %p105, %p106
      %p109 = scmp.ne.s32.totalorder %s92, %s108
      %p110 = scmp.eq.s32.totalorder %s18, 0
      %p111 = por %p109, %p110
      %p112 = scmp.le.s32.totalorder 1, %s12
      %p113 = scmp.lt.s32.totalorder %s12, 3
      %p114 = pnand %p112, %p113
      %p115 = pneg %p114
      // Predicated region
      $region9: #{tpu_custom_call.1} parent=5 // pred_check
        _
      $region10: #{tpu_custom_call.1} parent=5 // pred_check_branch
        %117 = sbr.rel (%p114) target = $region12
      $region11: #{tpu_custom_call.1} parent=5 // pred_region
        %s118 = ssub.s32 %s12, 1
        // Predicated region
        $region13: #{tpu_custom_call.1} parent=11 // pred_check
          %p119 = pneg %p76
        $region14: #{tpu_custom_call.1} parent=11 // pred_check_branch
          %121 = sbr.rel (%p119) target = $region16
        $region15: #{tpu_custom_call.1} parent=11 // pred_region
          %s122 = smul.u32 32, %s22
          %124 = vsyncadd [#allocation3], 0
          %s125 = smul.addr %s122, 4
          %s126 = scalar_lea.hbm %s1, %s125
          %s128 = sshll.u32 %s126, 4
          %s129 = int_to_ptr.hbm [resolvable:$true] %s128
          %s130 = sshll.u32 [#allocation2], 4
          %s131 = int_to_ptr.vmem [resolvable:$true] %s130
          %133 = dma.hbm_to_vmem [thread:$0]  %s129, 2048, %s131, [#allocation3]
        $region16: #{tpu_custom_call.1} parent=11 // pred_fallthru
          _
      $region12: #{tpu_custom_call.1} parent=5 // pred_fallthru
        _
      %p134 = scmp.lt.s32.totalorder %s12, 2
      // Predicated region
      $region17: #{tpu_custom_call.1} parent=5 // pred_check
        %p135 = pneg %p134
      $region18: #{tpu_custom_call.1} parent=5 // pred_check_branch
        %137 = sbr.rel (%p135) target = $region20
      $region19: #{tpu_custom_call.1} parent=5 // pred_region
        // Predicated region
        $region21: #{tpu_custom_call.1} parent=19 // pred_check
          %p138 = pneg %p44
        $region22: #{tpu_custom_call.1} parent=19 // pred_check_branch
          %140 = sbr.rel (%p138) target = $region24
        $region23: #{tpu_custom_call.1} parent=19 // pred_region
          %s141 = smul.u32 12, %s19
          %p142 = scmp.lt.s32.totalorder %s141, 23
          %s143 = scalar_select %p142, %s141, 23
          %s144 = smul.addr %s143, 8
          %s145 = scalar_lea.vmem %s0, %s144
          %s146 = smul.u32 12, %s19
        $region24: #{tpu_custom_call.1} parent=19 // pred_fallthru
          _
      $region20: #{tpu_custom_call.1} parent=5 // pred_fallthru
        _
      %p147 = scmp.le.s32.totalorder 1, %s12
      %p148 = scmp.lt.s32.totalorder %s12, 3
      %p149 = pnand %p147, %p148
      %p150 = pneg %p149
      // Predicated region
      $region25: #{tpu_custom_call.1} parent=5 // pred_check
        _
      $region26: #{tpu_custom_call.1} parent=5 // pred_check_branch
        %152 = sbr.rel (%p149) target = $region28
      $region27: #{tpu_custom_call.1} parent=5 // pred_region
        %s153 = ssub.s32 %s12, 1
        // Predicated region
        $region29: #{tpu_custom_call.1} parent=27 // pred_check
          %p154 = pneg %p76
        $region30: #{tpu_custom_call.1} parent=27 // pred_check_branch
          %156 = sbr.rel (%p154) target = $region32
        $region31: #{tpu_custom_call.1} parent=27 // pred_region
          %158 = dma.done [#allocation3], 2048
        $region32: #{tpu_custom_call.1} parent=27 // pred_fallthru
          _
        %s159 = smul.u32 12, %s21
        %p160 = scmp.lt.s32.totalorder %s159, 23
        %s161 = scalar_select %p160, %s159, 23
        %s162 = smul.addr %s161, 8
        %s163 = scalar_lea.vmem %s0, %s162
        %p164 = pneg %p50
        %p165 = pneg %p47
        %p166 = pneg %p76
        %p167 = pneg %p73
        %p168 = pneg %p104
        %p169 = pneg %p101
        %s170 = sand.u32 %s91, 1
        %s171 = scalar_lea.sflag [#allocation4], %s170
        %s172 = sand.u32 %s91, 1
        %s173 = smul.addr %s172, 3072
        %s174 = scalar_lea.vmem [#allocation5], %s173
        %s175 = smul.u32 12, %s21
        %p176 = scmp.lt.s32.totalorder %s175, 23
        %s177 = scalar_select %p176, %s175, 23
        %s178 = smul.addr %s177, 8
        %s179 = scalar_lea.vmem %s0, %s178
        %s180 = smul.u32 12, %s21
        %s181 = smul.u32 32, %s22
        %s182 = smul.u32 12, %s21
        %s183 = smul.u32 32, %s22
        %v184 = vld [vmem:[%s179] sm:$0xff]
        %v185 = vld [vmem:[%s179 + $0x8] sm:$0xff]
        %v186 = vld [vmem:[%s179 + $0x10] sm:$0xff]
        %v187 = vld [vmem:[%s179 + $0x18] sm:$0xff]
        %v188 = vld [vmem:[%s179 + $0x20] sm:$0xff]
        %v189 = vld [vmem:[%s179 + $0x28] sm:$0xff]
        %v190 = vld [vmem:[%s179 + $0x30] sm:$0xff]
        %v191 = vld [vmem:[%s179 + $0x38] sm:$0xff]
        %v192 = vld [vmem:[%s179 + $0x40] sm:$0xff]
        %v193 = vld [vmem:[%s179 + $0x48] sm:$0xff]
        %v194 = vld [vmem:[%s179 + $0x50] sm:$0xff]
        %v195 = vld [vmem:[%s179 + $0x58] sm:$0xff]
        %v196 = vld [vmem:[#allocation2] ss:$4 sm:$0xff]
        %s197 = scalar_lea.vmem [#allocation2], 32
        %v198 = vld [vmem:[%s197] ss:$4 sm:$0xff]
        %s199 = scalar_lea.vmem [#allocation2], 64
        %v200 = vld [vmem:[%s199] ss:$4 sm:$0xff]
        %s201 = scalar_lea.vmem [#allocation2], 96
        %v202 = vld [vmem:[%s201] ss:$4 sm:$0xff]
        %s203 = scalar_lea.vmem [#allocation2], 1
        %v204 = vld [vmem:[%s203] ss:$4 sm:$0xff]
        %s205 = scalar_lea.vmem [#allocation2], 33
        %v206 = vld [vmem:[%s205] ss:$4 sm:$0xff]
        %s207 = scalar_lea.vmem [#allocation2], 65
        %v208 = vld [vmem:[%s207] ss:$4 sm:$0xff]
        %s209 = scalar_lea.vmem [#allocation2], 97
        %v210 = vld [vmem:[%s209] ss:$4 sm:$0xff]
        %s211 = scalar_lea.vmem [#allocation2], 2
        %v212 = vld [vmem:[%s211] ss:$4 sm:$0xff]
        %s213 = scalar_lea.vmem [#allocation2], 34
        %v214 = vld [vmem:[%s213] ss:$4 sm:$0xff]
        %s215 = scalar_lea.vmem [#allocation2], 66
        %v216 = vld [vmem:[%s215] ss:$4 sm:$0xff]
        %s217 = scalar_lea.vmem [#allocation2], 98
        %v218 = vld [vmem:[%s217] ss:$4 sm:$0xff]
        %220 = vset.pattern.permute.xlu0 0
        %221 = vperm.xlu0 %220, %v184
        %v222 = vpop.permute.xlu0 %221
        %225 = vset.pattern.permute.xlu0 0
        %226 = vperm.xlu0 %225, %v185
        %v227 = vpop.permute.xlu0 %226
        %230 = vset.pattern.permute.xlu0 0
        %231 = vperm.xlu0 %230, %v186
        %v232 = vpop.permute.xlu0 %231
        %235 = vset.pattern.permute.xlu0 0
        %236 = vperm.xlu0 %235, %v187
        %v237 = vpop.permute.xlu0 %236
        %240 = vset.pattern.permute.xlu0 0
        %241 = vperm.xlu0 %240, %v188
        %v242 = vpop.permute.xlu0 %241
        %245 = vset.pattern.permute.xlu0 0
        %246 = vperm.xlu0 %245, %v189
        %v247 = vpop.permute.xlu0 %246
        %250 = vset.pattern.permute.xlu0 0
        %251 = vperm.xlu0 %250, %v190
        %v252 = vpop.permute.xlu0 %251
        %255 = vset.pattern.permute.xlu0 0
        %256 = vperm.xlu0 %255, %v191
        %v257 = vpop.permute.xlu0 %256
        %260 = vset.pattern.permute.xlu0 0
        %261 = vperm.xlu0 %260, %v192
        %v262 = vpop.permute.xlu0 %261
        %265 = vset.pattern.permute.xlu0 0
        %266 = vperm.xlu0 %265, %v193
        %v267 = vpop.permute.xlu0 %266
        %270 = vset.pattern.permute.xlu0 0
        %271 = vperm.xlu0 %270, %v194
        %v272 = vpop.permute.xlu0 %271
        %275 = vset.pattern.permute.xlu0 0
        %276 = vperm.xlu0 %275, %v195
        %v277 = vpop.permute.xlu0 %276
        %v283 = vperm.slane %v196, 0
        %v284 = vperm.slane %v196, 1
        %v285 = vperm.slane %v196, 2
        %v286 = vperm.slane %v196, 3
        %v287 = vperm.slane %v196, 4
        %v288 = vperm.slane %v196, 5
        %v289 = vperm.slane %v196, 6
        %v290 = vperm.slane %v196, 7
        %v291 = vperm.slane %v198, 0
        %v292 = vperm.slane %v198, 1
        %v293 = vperm.slane %v198, 2
        %v294 = vperm.slane %v198, 3
        %v295 = vperm.slane %v198, 4
        %v296 = vperm.slane %v198, 5
        %v297 = vperm.slane %v198, 6
        %v298 = vperm.slane %v198, 7
        %v299 = vperm.slane %v200, 0
        %v300 = vperm.slane %v200, 1
        %v301 = vperm.slane %v200, 2
        %v302 = vperm.slane %v200, 3
        %v303 = vperm.slane %v200, 4
        %v304 = vperm.slane %v200, 5
        %v305 = vperm.slane %v200, 6
        %v306 = vperm.slane %v200, 7
        %v307 = vperm.slane %v202, 0
        %v308 = vperm.slane %v202, 1
        %v309 = vperm.slane %v202, 2
        %v310 = vperm.slane %v202, 3
        %v311 = vperm.slane %v202, 4
        %v312 = vperm.slane %v202, 5
        %v313 = vperm.slane %v202, 6
        %v314 = vperm.slane %v202, 7
        %v347 = vmul.f32 %v222, %v283
        %v348 = vmul.f32 %v222, %v284
        %v349 = vmul.f32 %v222, %v285
        %v350 = vmul.f32 %v222, %v286
        %v351 = vmul.f32 %v222, %v287
        %v352 = vmul.f32 %v222, %v288
        %v353 = vmul.f32 %v222, %v289
        %v354 = vmul.f32 %v222, %v290
        %v355 = vmul.f32 %v222, %v291
        %v356 = vmul.f32 %v222, %v292
        %v357 = vmul.f32 %v222, %v293
        %v358 = vmul.f32 %v222, %v294
        %v359 = vmul.f32 %v222, %v295
        %v360 = vmul.f32 %v222, %v296
        %v361 = vmul.f32 %v222, %v297
        %v362 = vmul.f32 %v222, %v298
        %v363 = vmul.f32 %v222, %v299
        %v364 = vmul.f32 %v222, %v300
        %v365 = vmul.f32 %v222, %v301
        %v366 = vmul.f32 %v222, %v302
        %v367 = vmul.f32 %v222, %v303
        %v368 = vmul.f32 %v222, %v304
        %v369 = vmul.f32 %v222, %v305
        %v370 = vmul.f32 %v222, %v306
        %v371 = vmul.f32 %v222, %v307
        %v372 = vmul.f32 %v222, %v308
        %v373 = vmul.f32 %v222, %v309
        %v374 = vmul.f32 %v222, %v310
        %v375 = vmul.f32 %v222, %v311
        %v376 = vmul.f32 %v222, %v312
        %v377 = vmul.f32 %v222, %v313
        %v378 = vmul.f32 %v222, %v314
        %v379 = vmul.f32 %v227, %v283
        %v380 = vmul.f32 %v227, %v284
        %v381 = vmul.f32 %v227, %v285
        %v382 = vmul.f32 %v227, %v286
        %v383 = vmul.f32 %v227, %v287
        %v384 = vmul.f32 %v227, %v288
        %v385 = vmul.f32 %v227, %v289
        %v386 = vmul.f32 %v227, %v290
        %v387 = vmul.f32 %v227, %v291
        %v388 = vmul.f32 %v227, %v292
        %v389 = vmul.f32 %v227, %v293
        %v390 = vmul.f32 %v227, %v294
        %v391 = vmul.f32 %v227, %v295
        %v392 = vmul.f32 %v227, %v296
        %v393 = vmul.f32 %v227, %v297
        %v394 = vmul.f32 %v227, %v298
        %v395 = vmul.f32 %v227, %v299
        %v396 = vmul.f32 %v227, %v300
        %v397 = vmul.f32 %v227, %v301
        %v398 = vmul.f32 %v227, %v302
        %v399 = vmul.f32 %v227, %v303
        %v400 = vmul.f32 %v227, %v304
        %v401 = vmul.f32 %v227, %v305
        %v402 = vmul.f32 %v227, %v306
        %v403 = vmul.f32 %v227, %v307
        %v404 = vmul.f32 %v227, %v308
        %v405 = vmul.f32 %v227, %v309
        %v406 = vmul.f32 %v227, %v310
        %v407 = vmul.f32 %v227, %v311
        %v408 = vmul.f32 %v227, %v312
        %v409 = vmul.f32 %v227, %v313
        %v410 = vmul.f32 %v227, %v314
        %v411 = vmul.f32 %v232, %v283
        %v412 = vmul.f32 %v232, %v284
        %v413 = vmul.f32 %v232, %v285
        %v414 = vmul.f32 %v232, %v286
        %v415 = vmul.f32 %v232, %v287
        %v416 = vmul.f32 %v232, %v288
        %v417 = vmul.f32 %v232, %v289
        %v418 = vmul.f32 %v232, %v290
        %v419 = vmul.f32 %v232, %v291
        %v420 = vmul.f32 %v232, %v292
        %v421 = vmul.f32 %v232, %v293
        %v422 = vmul.f32 %v232, %v294
        %v423 = vmul.f32 %v232, %v295
        %v424 = vmul.f32 %v232, %v296
        %v425 = vmul.f32 %v232, %v297
        %v426 = vmul.f32 %v232, %v298
        %v427 = vmul.f32 %v232, %v299
        %v428 = vmul.f32 %v232, %v300
        %v429 = vmul.f32 %v232, %v301
        %v430 = vmul.f32 %v232, %v302
        %v431 = vmul.f32 %v232, %v303
        %v432 = vmul.f32 %v232, %v304
        %v433 = vmul.f32 %v232, %v305
        %v434 = vmul.f32 %v232, %v306
        %v435 = vmul.f32 %v232, %v307
        %v436 = vmul.f32 %v232, %v308
        %v437 = vmul.f32 %v232, %v309
        %v438 = vmul.f32 %v232, %v310
        %v439 = vmul.f32 %v232, %v311
        %v440 = vmul.f32 %v232, %v312
        %v441 = vmul.f32 %v232, %v313
        %v442 = vmul.f32 %v232, %v314
        %v443 = vmul.f32 %v237, %v283
        %v444 = vmul.f32 %v237, %v284
        %v445 = vmul.f32 %v237, %v285
        %v446 = vmul.f32 %v237, %v286
        %v447 = vmul.f32 %v237, %v287
        %v448 = vmul.f32 %v237, %v288
        %v449 = vmul.f32 %v237, %v289
        %v450 = vmul.f32 %v237, %v290
        %v451 = vmul.f32 %v237, %v291
        %v452 = vmul.f32 %v237, %v292
        %v453 = vmul.f32 %v237, %v293
        %v454 = vmul.f32 %v237, %v294
        %v455 = vmul.f32 %v237, %v295
        %v456 = vmul.f32 %v237, %v296
        %v457 = vmul.f32 %v237, %v297
        %v458 = vmul.f32 %v237, %v298
        %v459 = vmul.f32 %v237, %v299
        %v460 = vmul.f32 %v237, %v300
        %v461 = vmul.f32 %v237, %v301
        %v462 = vmul.f32 %v237, %v302
        %v463 = vmul.f32 %v237, %v303
        %v464 = vmul.f32 %v237, %v304
        %v465 = vmul.f32 %v237, %v305
        %v466 = vmul.f32 %v237, %v306
        %v467 = vmul.f32 %v237, %v307
        %v468 = vmul.f32 %v237, %v308
        %v469 = vmul.f32 %v237, %v309
        %v470 = vmul.f32 %v237, %v310
        %v471 = vmul.f32 %v237, %v311
        %v472 = vmul.f32 %v237, %v312
        %v473 = vmul.f32 %v237, %v313
        %v474 = vmul.f32 %v237, %v314
        %v475 = vmul.f32 %v242, %v283
        %v476 = vmul.f32 %v242, %v284
        %v477 = vmul.f32 %v242, %v285
        %v478 = vmul.f32 %v242, %v286
        %v479 = vmul.f32 %v242, %v287
        %v480 = vmul.f32 %v242, %v288
        %v481 = vmul.f32 %v242, %v289
        %v482 = vmul.f32 %v242, %v290
        %v483 = vmul.f32 %v242, %v291
        %v484 = vmul.f32 %v242, %v292
        %v485 = vmul.f32 %v242, %v293
        %v486 = vmul.f32 %v242, %v294
        %v487 = vmul.f32 %v242, %v295
        %v488 = vmul.f32 %v242, %v296
        %v489 = vmul.f32 %v242, %v297
        %v490 = vmul.f32 %v242, %v298
        %v491 = vmul.f32 %v242, %v299
        %v492 = vmul.f32 %v242, %v300
        %v493 = vmul.f32 %v242, %v301
        %v494 = vmul.f32 %v242, %v302
        %v495 = vmul.f32 %v242, %v303
        %v496 = vmul.f32 %v242, %v304
        %v497 = vmul.f32 %v242, %v305
        %v498 = vmul.f32 %v242, %v306
        %v499 = vmul.f32 %v242, %v307
        %v500 = vmul.f32 %v242, %v308
        %v501 = vmul.f32 %v242, %v309
        %v502 = vmul.f32 %v242, %v310
        %v503 = vmul.f32 %v242, %v311
        %v504 = vmul.f32 %v242, %v312
        %v505 = vmul.f32 %v242, %v313
        %v506 = vmul.f32 %v242, %v314
        %v507 = vmul.f32 %v247, %v283
        %v508 = vmul.f32 %v247, %v284
        %v509 = vmul.f32 %v247, %v285
        %v510 = vmul.f32 %v247, %v286
        %v511 = vmul.f32 %v247, %v287
        %v512 = vmul.f32 %v247, %v288
        %v513 = vmul.f32 %v247, %v289
        %v514 = vmul.f32 %v247, %v290
        %v515 = vmul.f32 %v247, %v291
        %v516 = vmul.f32 %v247, %v292
        %v517 = vmul.f32 %v247, %v293
        %v518 = vmul.f32 %v247, %v294
        %v519 = vmul.f32 %v247, %v295
        %v520 = vmul.f32 %v247, %v296
        %v521 = vmul.f32 %v247, %v297
        %v522 = vmul.f32 %v247, %v298
        %v523 = vmul.f32 %v247, %v299
        %v524 = vmul.f32 %v247, %v300
        %v525 = vmul.f32 %v247, %v301
        %v526 = vmul.f32 %v247, %v302
        %v527 = vmul.f32 %v247, %v303
        %v528 = vmul.f32 %v247, %v304
        %v529 = vmul.f32 %v247, %v305
        %v530 = vmul.f32 %v247, %v306
        %v531 = vmul.f32 %v247, %v307
        %v532 = vmul.f32 %v247, %v308
        %v533 = vmul.f32 %v247, %v309
        %v534 = vmul.f32 %v247, %v310
        %v535 = vmul.f32 %v247, %v311
        %v536 = vmul.f32 %v247, %v312
        %v537 = vmul.f32 %v247, %v313
        %v538 = vmul.f32 %v247, %v314
        %v539 = vmul.f32 %v252, %v283
        %v540 = vmul.f32 %v252, %v284
        %v541 = vmul.f32 %v252, %v285
        %v542 = vmul.f32 %v252, %v286
        %v543 = vmul.f32 %v252, %v287
        %v544 = vmul.f32 %v252, %v288
        %v545 = vmul.f32 %v252, %v289
        %v546 = vmul.f32 %v252, %v290
        %v547 = vmul.f32 %v252, %v291
        %v548 = vmul.f32 %v252, %v292
        %v549 = vmul.f32 %v252, %v293
        %v550 = vmul.f32 %v252, %v294
        %v551 = vmul.f32 %v252, %v295
        %v552 = vmul.f32 %v252, %v296
        %v553 = vmul.f32 %v252, %v297
        %v554 = vmul.f32 %v252, %v298
        %v555 = vmul.f32 %v252, %v299
        %v556 = vmul.f32 %v252, %v300
        %v557 = vmul.f32 %v252, %v301
        %v558 = vmul.f32 %v252, %v302
        %v559 = vmul.f32 %v252, %v303
        %v560 = vmul.f32 %v252, %v304
        %v561 = vmul.f32 %v252, %v305
        %v562 = vmul.f32 %v252, %v306
        %v563 = vmul.f32 %v252, %v307
        %v564 = vmul.f32 %v252, %v308
        %v565 = vmul.f32 %v252, %v309
        %v566 = vmul.f32 %v252, %v310
        %v567 = vmul.f32 %v252, %v311
        %v568 = vmul.f32 %v252, %v312
        %v569 = vmul.f32 %v252, %v313
        %v570 = vmul.f32 %v252, %v314
        %v571 = vmul.f32 %v257, %v283
        %v572 = vmul.f32 %v257, %v284
        %v573 = vmul.f32 %v257, %v285
        %v574 = vmul.f32 %v257, %v286
        %v575 = vmul.f32 %v257, %v287
        %v576 = vmul.f32 %v257, %v288
        %v577 = vmul.f32 %v257, %v289
        %v578 = vmul.f32 %v257, %v290
        %v579 = vmul.f32 %v257, %v291
        %v580 = vmul.f32 %v257, %v292
        %v581 = vmul.f32 %v257, %v293
        %v582 = vmul.f32 %v257, %v294
        %v583 = vmul.f32 %v257, %v295
        %v584 = vmul.f32 %v257, %v296
        %v585 = vmul.f32 %v257, %v297
        %v586 = vmul.f32 %v257, %v298
        %v587 = vmul.f32 %v257, %v299
        %v588 = vmul.f32 %v257, %v300
        %v589 = vmul.f32 %v257, %v301
        %v590 = vmul.f32 %v257, %v302
        %v591 = vmul.f32 %v257, %v303
        %v592 = vmul.f32 %v257, %v304
        %v593 = vmul.f32 %v257, %v305
        %v594 = vmul.f32 %v257, %v306
        %v595 = vmul.f32 %v257, %v307
        %v596 = vmul.f32 %v257, %v308
        %v597 = vmul.f32 %v257, %v309
        %v598 = vmul.f32 %v257, %v310
        %v599 = vmul.f32 %v257, %v311
        %v600 = vmul.f32 %v257, %v312
        %v601 = vmul.f32 %v257, %v313
        %v602 = vmul.f32 %v257, %v314
        %v603 = vmul.f32 %v262, %v283
        %v604 = vmul.f32 %v262, %v284
        %v605 = vmul.f32 %v262, %v285
        %v606 = vmul.f32 %v262, %v286
        %v607 = vmul.f32 %v262, %v287
        %v608 = vmul.f32 %v262, %v288
        %v609 = vmul.f32 %v262, %v289
        %v610 = vmul.f32 %v262, %v290
        %v611 = vmul.f32 %v262, %v291
        %v612 = vmul.f32 %v262, %v292
        %v613 = vmul.f32 %v262, %v293
        %v614 = vmul.f32 %v262, %v294
        %v615 = vmul.f32 %v262, %v295
        %v616 = vmul.f32 %v262, %v296
        %v617 = vmul.f32 %v262, %v297
        %v618 = vmul.f32 %v262, %v298
        %v619 = vmul.f32 %v262, %v299
        %v620 = vmul.f32 %v262, %v300
        %v621 = vmul.f32 %v262, %v301
        %v622 = vmul.f32 %v262, %v302
        %v623 = vmul.f32 %v262, %v303
        %v624 = vmul.f32 %v262, %v304
        %v625 = vmul.f32 %v262, %v305
        %v626 = vmul.f32 %v262, %v306
        %v627 = vmul.f32 %v262, %v307
        %v628 = vmul.f32 %v262, %v308
        %v629 = vmul.f32 %v262, %v309
        %v630 = vmul.f32 %v262, %v310
        %v631 = vmul.f32 %v262, %v311
        %v632 = vmul.f32 %v262, %v312
        %v633 = vmul.f32 %v262, %v313
        %v634 = vmul.f32 %v262, %v314
        %v635 = vmul.f32 %v267, %v283
        %v636 = vmul.f32 %v267, %v284
        %v637 = vmul.f32 %v267, %v285
        %v638 = vmul.f32 %v267, %v286
        %v639 = vmul.f32 %v267, %v287
        %v640 = vmul.f32 %v267, %v288
        %v641 = vmul.f32 %v267, %v289
        %v642 = vmul.f32 %v267, %v290
        %v643 = vmul.f32 %v267, %v291
        %v644 = vmul.f32 %v267, %v292
        %v645 = vmul.f32 %v267, %v293
        %v646 = vmul.f32 %v267, %v294
        %v647 = vmul.f32 %v267, %v295
        %v648 = vmul.f32 %v267, %v296
        %v649 = vmul.f32 %v267, %v297
        %v650 = vmul.f32 %v267, %v298
        %v651 = vmul.f32 %v267, %v299
        %v652 = vmul.f32 %v267, %v300
        %v653 = vmul.f32 %v267, %v301
        %v654 = vmul.f32 %v267, %v302
        %v655 = vmul.f32 %v267, %v303
        %v656 = vmul.f32 %v267, %v304
        %v657 = vmul.f32 %v267, %v305
        %v658 = vmul.f32 %v267, %v306
        %v659 = vmul.f32 %v267, %v307
        %v660 = vmul.f32 %v267, %v308
        %v661 = vmul.f32 %v267, %v309
        %v662 = vmul.f32 %v267, %v310
        %v663 = vmul.f32 %v267, %v311
        %v664 = vmul.f32 %v267, %v312
        %v665 = vmul.f32 %v267, %v313
        %v666 = vmul.f32 %v267, %v314
        %v667 = vmul.f32 %v272, %v283
        %v668 = vmul.f32 %v272, %v284
        %v669 = vmul.f32 %v272, %v285
        %v670 = vmul.f32 %v272, %v286
        %v671 = vmul.f32 %v272, %v287
        %v672 = vmul.f32 %v272, %v288
        %v673 = vmul.f32 %v272, %v289
        %v674 = vmul.f32 %v272, %v290
        %v675 = vmul.f32 %v272, %v291
        %v676 = vmul.f32 %v272, %v292
        %v677 = vmul.f32 %v272, %v293
        %v678 = vmul.f32 %v272, %v294
        %v679 = vmul.f32 %v272, %v295
        %v680 = vmul.f32 %v272, %v296
        %v681 = vmul.f32 %v272, %v297
        %v682 = vmul.f32 %v272, %v298
        %v683 = vmul.f32 %v272, %v299
        %v684 = vmul.f32 %v272, %v300
        %v685 = vmul.f32 %v272, %v301
        %v686 = vmul.f32 %v272, %v302
        %v687 = vmul.f32 %v272, %v303
        %v688 = vmul.f32 %v272, %v304
        %v689 = vmul.f32 %v272, %v305
        %v690 = vmul.f32 %v272, %v306
        %v691 = vmul.f32 %v272, %v307
        %v692 = vmul.f32 %v272, %v308
        %v693 = vmul.f32 %v272, %v309
        %v694 = vmul.f32 %v272, %v310
        %v695 = vmul.f32 %v272, %v311
        %v696 = vmul.f32 %v272, %v312
        %v697 = vmul.f32 %v272, %v313
        %v698 = vmul.f32 %v272, %v314
        %v699 = vmul.f32 %v277, %v283
        %v700 = vmul.f32 %v277, %v284
        %v701 = vmul.f32 %v277, %v285
        %v702 = vmul.f32 %v277, %v286
        %v703 = vmul.f32 %v277, %v287
        %v704 = vmul.f32 %v277, %v288
        %v705 = vmul.f32 %v277, %v289
        %v706 = vmul.f32 %v277, %v290
        %v707 = vmul.f32 %v277, %v291
        %v708 = vmul.f32 %v277, %v292
        %v709 = vmul.f32 %v277, %v293
        %v710 = vmul.f32 %v277, %v294
        %v711 = vmul.f32 %v277, %v295
        %v712 = vmul.f32 %v277, %v296
        %v713 = vmul.f32 %v277, %v297
        %v714 = vmul.f32 %v277, %v298
        %v715 = vmul.f32 %v277, %v299
        %v716 = vmul.f32 %v277, %v300
        %v717 = vmul.f32 %v277, %v301
        %v718 = vmul.f32 %v277, %v302
        %v719 = vmul.f32 %v277, %v303
        %v720 = vmul.f32 %v277, %v304
        %v721 = vmul.f32 %v277, %v305
        %v722 = vmul.f32 %v277, %v306
        %v723 = vmul.f32 %v277, %v307
        %v724 = vmul.f32 %v277, %v308
        %v725 = vmul.f32 %v277, %v309
        %v726 = vmul.f32 %v277, %v310
        %v727 = vmul.f32 %v277, %v311
        %v728 = vmul.f32 %v277, %v312
        %v729 = vmul.f32 %v277, %v313
        %v730 = vmul.f32 %v277, %v314
        %731 = vset.pattern.permute.xlu0 1
        %732 = vperm.xlu0 %731, %v184
        %v733 = vpop.permute.xlu0 %732
        %735 = vset.pattern.permute.xlu0 1
        %736 = vperm.xlu0 %735, %v185
        %v737 = vpop.permute.xlu0 %736
        %739 = vset.pattern.permute.xlu0 1
        %740 = vperm.xlu0 %739, %v186
        %v741 = vpop.permute.xlu0 %740
        %743 = vset.pattern.permute.xlu0 1
        %744 = vperm.xlu0 %743, %v187
        %v745 = vpop.permute.xlu0 %744
        %747 = vset.pattern.permute.xlu0 1
        %748 = vperm.xlu0 %747, %v188
        %v749 = vpop.permute.xlu0 %748
        %751 = vset.pattern.permute.xlu0 1
        %752 = vperm.xlu0 %751, %v189
        %v753 = vpop.permute.xlu0 %752
        %755 = vset.pattern.permute.xlu0 1
        %756 = vperm.xlu0 %755, %v190
        %v757 = vpop.permute.xlu0 %756
        %759 = vset.pattern.permute.xlu0 1
        %760 = vperm.xlu0 %759, %v191
        %v761 = vpop.permute.xlu0 %760
        %763 = vset.pattern.permute.xlu0 1
        %764 = vperm.xlu0 %763, %v192
        %v765 = vpop.permute.xlu0 %764
        %767 = vset.pattern.permute.xlu0 1
        %768 = vperm.xlu0 %767, %v193
        %v769 = vpop.permute.xlu0 %768
        %771 = vset.pattern.permute.xlu0 1
        %772 = vperm.xlu0 %771, %v194
        %v773 = vpop.permute.xlu0 %772
        %775 = vset.pattern.permute.xlu0 1
        %776 = vperm.xlu0 %775, %v195
        %v777 = vpop.permute.xlu0 %776
        %v783 = vperm.slane %v204, 0
        %v784 = vperm.slane %v204, 1
        %v785 = vperm.slane %v204, 2
        %v786 = vperm.slane %v204, 3
        %v787 = vperm.slane %v204, 4
        %v788 = vperm.slane %v204, 5
        %v789 = vperm.slane %v204, 6
        %v790 = vperm.slane %v204, 7
        %v791 = vperm.slane %v206, 0
        %v792 = vperm.slane %v206, 1
        %v793 = vperm.slane %v206, 2
        %v794 = vperm.slane %v206, 3
        %v795 = vperm.slane %v206, 4
        %v796 = vperm.slane %v206, 5
        %v797 = vperm.slane %v206, 6
        %v798 = vperm.slane %v206, 7
        %v799 = vperm.slane %v208, 0
        %v800 = vperm.slane %v208, 1
        %v801 = vperm.slane %v208, 2
        %v802 = vperm.slane %v208, 3
        %v803 = vperm.slane %v208, 4
        %v804 = vperm.slane %v208, 5
        %v805 = vperm.slane %v208, 6
        %v806 = vperm.slane %v208, 7
        %v807 = vperm.slane %v210, 0
        %v808 = vperm.slane %v210, 1
        %v809 = vperm.slane %v210, 2
        %v810 = vperm.slane %v210, 3
        %v811 = vperm.slane %v210, 4
        %v812 = vperm.slane %v210, 5
        %v813 = vperm.slane %v210, 6
        %v814 = vperm.slane %v210, 7
        %v847 = vmul.f32 %v733, %v783
        %v848 = vmul.f32 %v733, %v784
        %v849 = vmul.f32 %v733, %v785
        %v850 = vmul.f32 %v733, %v786
        %v851 = vmul.f32 %v733, %v787
        %v852 = vmul.f32 %v733, %v788
        %v853 = vmul.f32 %v733, %v789
        %v854 = vmul.f32 %v733, %v790
        %v855 = vmul.f32 %v733, %v791
        %v856 = vmul.f32 %v733, %v792
        %v857 = vmul.f32 %v733, %v793
        %v858 = vmul.f32 %v733, %v794
        %v859 = vmul.f32 %v733, %v795
        %v860 = vmul.f32 %v733, %v796
        %v861 = vmul.f32 %v733, %v797
        %v862 = vmul.f32 %v733, %v798
        %v863 = vmul.f32 %v733, %v799
        %v864 = vmul.f32 %v733, %v800
        %v865 = vmul.f32 %v733, %v801
        %v866 = vmul.f32 %v733, %v802
        %v867 = vmul.f32 %v733, %v803
        %v868 = vmul.f32 %v733, %v804
        %v869 = vmul.f32 %v733, %v805
        %v870 = vmul.f32 %v733, %v806
        %v871 = vmul.f32 %v733, %v807
        %v872 = vmul.f32 %v733, %v808
        %v873 = vmul.f32 %v733, %v809
        %v874 = vmul.f32 %v733, %v810
        %v875 = vmul.f32 %v733, %v811
        %v876 = vmul.f32 %v733, %v812
        %v877 = vmul.f32 %v733, %v813
        %v878 = vmul.f32 %v733, %v814
        %v879 = vmul.f32 %v737, %v783
        %v880 = vmul.f32 %v737, %v784
        %v881 = vmul.f32 %v737, %v785
        %v882 = vmul.f32 %v737, %v786
        %v883 = vmul.f32 %v737, %v787
        %v884 = vmul.f32 %v737, %v788
        %v885 = vmul.f32 %v737, %v789
        %v886 = vmul.f32 %v737, %v790
        %v887 = vmul.f32 %v737, %v791
        %v888 = vmul.f32 %v737, %v792
        %v889 = vmul.f32 %v737, %v793
        %v890 = vmul.f32 %v737, %v794
        %v891 = vmul.f32 %v737, %v795
        %v892 = vmul.f32 %v737, %v796
        %v893 = vmul.f32 %v737, %v797
        %v894 = vmul.f32 %v737, %v798
        %v895 = vmul.f32 %v737, %v799
        %v896 = vmul.f32 %v737, %v800
        %v897 = vmul.f32 %v737, %v801
        %v898 = vmul.f32 %v737, %v802
        %v899 = vmul.f32 %v737, %v803
        %v900 = vmul.f32 %v737, %v804
        %v901 = vmul.f32 %v737, %v805
        %v902 = vmul.f32 %v737, %v806
        %v903 = vmul.f32 %v737, %v807
        %v904 = vmul.f32 %v737, %v808
        %v905 = vmul.f32 %v737, %v809
        %v906 = vmul.f32 %v737, %v810
        %v907 = vmul.f32 %v737, %v811
        %v908 = vmul.f32 %v737, %v812
        %v909 = vmul.f32 %v737, %v813
        %v910 = vmul.f32 %v737, %v814
        %v911 = vmul.f32 %v741, %v783
        %v912 = vmul.f32 %v741, %v784
        %v913 = vmul.f32 %v741, %v785
        %v914 = vmul.f32 %v741, %v786
        %v915 = vmul.f32 %v741, %v787
        %v916 = vmul.f32 %v741, %v788
        %v917 = vmul.f32 %v741, %v789
        %v918 = vmul.f32 %v741, %v790
        %v919 = vmul.f32 %v741, %v791
        %v920 = vmul.f32 %v741, %v792
        %v921 = vmul.f32 %v741, %v793
        %v922 = vmul.f32 %v741, %v794
        %v923 = vmul.f32 %v741, %v795
        %v924 = vmul.f32 %v741, %v796
        %v925 = vmul.f32 %v741, %v797
        %v926 = vmul.f32 %v741, %v798
        %v927 = vmul.f32 %v741, %v799
        %v928 = vmul.f32 %v741, %v800
        %v929 = vmul.f32 %v741, %v801
        %v930 = vmul.f32 %v741, %v802
        %v931 = vmul.f32 %v741, %v803
        %v932 = vmul.f32 %v741, %v804
        %v933 = vmul.f32 %v741, %v805
        %v934 = vmul.f32 %v741, %v806
        %v935 = vmul.f32 %v741, %v807
        %v936 = vmul.f32 %v741, %v808
        %v937 = vmul.f32 %v741, %v809
        %v938 = vmul.f32 %v741, %v810
        %v939 = vmul.f32 %v741, %v811
        %v940 = vmul.f32 %v741, %v812
        %v941 = vmul.f32 %v741, %v813
        %v942 = vmul.f32 %v741, %v814
        %v943 = vmul.f32 %v745, %v783
        %v944 = vmul.f32 %v745, %v784
        %v945 = vmul.f32 %v745, %v785
        %v946 = vmul.f32 %v745, %v786
        %v947 = vmul.f32 %v745, %v787
        %v948 = vmul.f32 %v745, %v788
        %v949 = vmul.f32 %v745, %v789
        %v950 = vmul.f32 %v745, %v790
        %v951 = vmul.f32 %v745, %v791
        %v952 = vmul.f32 %v745, %v792
        %v953 = vmul.f32 %v745, %v793
        %v954 = vmul.f32 %v745, %v794
        %v955 = vmul.f32 %v745, %v795
        %v956 = vmul.f32 %v745, %v796
        %v957 = vmul.f32 %v745, %v797
        %v958 = vmul.f32 %v745, %v798
        %v959 = vmul.f32 %v745, %v799
        %v960 = vmul.f32 %v745, %v800
        %v961 = vmul.f32 %v745, %v801
        %v962 = vmul.f32 %v745, %v802
        %v963 = vmul.f32 %v745, %v803
        %v964 = vmul.f32 %v745, %v804
        %v965 = vmul.f32 %v745, %v805
        %v966 = vmul.f32 %v745, %v806
        %v967 = vmul.f32 %v745, %v807
        %v968 = vmul.f32 %v745, %v808
        %v969 = vmul.f32 %v745, %v809
        %v970 = vmul.f32 %v745, %v810
        %v971 = vmul.f32 %v745, %v811
        %v972 = vmul.f32 %v745, %v812
        %v973 = vmul.f32 %v745, %v813
        %v974 = vmul.f32 %v745, %v814
        %v975 = vmul.f32 %v749, %v783
        %v976 = vmul.f32 %v749, %v784
        %v977 = vmul.f32 %v749, %v785
        %v978 = vmul.f32 %v749, %v786
        %v979 = vmul.f32 %v749, %v787
        %v980 = vmul.f32 %v749, %v788
        %v981 = vmul.f32 %v749, %v789
        %v982 = vmul.f32 %v749, %v790
        %v983 = vmul.f32 %v749, %v791
        %v984 = vmul.f32 %v749, %v792
        %v985 = vmul.f32 %v749, %v793
        %v986 = vmul.f32 %v749, %v794
        %v987 = vmul.f32 %v749, %v795
        %v988 = vmul.f32 %v749, %v796
        %v989 = vmul.f32 %v749, %v797
        %v990 = vmul.f32 %v749, %v798
        %v991 = vmul.f32 %v749, %v799
        %v992 = vmul.f32 %v749, %v800
        %v993 = vmul.f32 %v749, %v801
        %v994 = vmul.f32 %v749, %v802
        %v995 = vmul.f32 %v749, %v803
        %v996 = vmul.f32 %v749, %v804
        %v997 = vmul.f32 %v749, %v805
        %v998 = vmul.f32 %v749, %v806
        %v999 = vmul.f32 %v749, %v807
        %v1000 = vmul.f32 %v749, %v808
        %v1001 = vmul.f32 %v749, %v809
        %v1002 = vmul.f32 %v749, %v810
        %v1003 = vmul.f32 %v749, %v811
        %v1004 = vmul.f32 %v749, %v812
        %v1005 = vmul.f32 %v749, %v813
        %v1006 = vmul.f32 %v749, %v814
        %v1007 = vmul.f32 %v753, %v783
        %v1008 = vmul.f32 %v753, %v784
        %v1009 = vmul.f32 %v753, %v785
        %v1010 = vmul.f32 %v753, %v786
        %v1011 = vmul.f32 %v753, %v787
        %v1012 = vmul.f32 %v753, %v788
        %v1013 = vmul.f32 %v753, %v789
        %v1014 = vmul.f32 %v753, %v790
        %v1015 = vmul.f32 %v753, %v791
        %v1016 = vmul.f32 %v753, %v792
        %v1017 = vmul.f32 %v753, %v793
        %v1018 = vmul.f32 %v753, %v794
        %v1019 = vmul.f32 %v753, %v795
        %v1020 = vmul.f32 %v753, %v796
        %v1021 = vmul.f32 %v753, %v797
        %v1022 = vmul.f32 %v753, %v798
        %v1023 = vmul.f32 %v753, %v799
        %v1024 = vmul.f32 %v753, %v800
        %v1025 = vmul.f32 %v753, %v801
        %v1026 = vmul.f32 %v753, %v802
        %v1027 = vmul.f32 %v753, %v803
        %v1028 = vmul.f32 %v753, %v804
        %v1029 = vmul.f32 %v753, %v805
        %v1030 = vmul.f32 %v753, %v806
        %v1031 = vmul.f32 %v753, %v807
        %v1032 = vmul.f32 %v753, %v808
        %v1033 = vmul.f32 %v753, %v809
        %v1034 = vmul.f32 %v753, %v810
        %v1035 = vmul.f32 %v753, %v811
        %v1036 = vmul.f32 %v753, %v812
        %v1037 = vmul.f32 %v753, %v813
        %v1038 = vmul.f32 %v753, %v814
        %v1039 = vmul.f32 %v757, %v783
        %v1040 = vmul.f32 %v757, %v784
        %v1041 = vmul.f32 %v757, %v785
        %v1042 = vmul.f32 %v757, %v786
        %v1043 = vmul.f32 %v757, %v787
        %v1044 = vmul.f32 %v757, %v788
        %v1045 = vmul.f32 %v757, %v789
        %v1046 = vmul.f32 %v757, %v790
        %v1047 = vmul.f32 %v757, %v791
        %v1048 = vmul.f32 %v757, %v792
        %v1049 = vmul.f32 %v757, %v793
        %v1050 = vmul.f32 %v757, %v794
        %v1051 = vmul.f32 %v757, %v795
        %v1052 = vmul.f32 %v757, %v796
        %v1053 = vmul.f32 %v757, %v797
        %v1054 = vmul.f32 %v757, %v798
        %v1055 = vmul.f32 %v757, %v799
        %v1056 = vmul.f32 %v757, %v800
        %v1057 = vmul.f32 %v757, %v801
        %v1058 = vmul.f32 %v757, %v802
        %v1059 = vmul.f32 %v757, %v803
        %v1060 = vmul.f32 %v757, %v804
        %v1061 = vmul.f32 %v757, %v805
        %v1062 = vmul.f32 %v757, %v806
        %v1063 = vmul.f32 %v757, %v807
        %v1064 = vmul.f32 %v757, %v808
        %v1065 = vmul.f32 %v757, %v809
        %v1066 = vmul.f32 %v757, %v810
        %v1067 = vmul.f32 %v757, %v811
        %v1068 = vmul.f32 %v757, %v812
        %v1069 = vmul.f32 %v757, %v813
        %v1070 = vmul.f32 %v757, %v814
        %v1071 = vmul.f32 %v761, %v783
        %v1072 = vmul.f32 %v761, %v784
        %v1073 = vmul.f32 %v761, %v785
        %v1074 = vmul.f32 %v761, %v786
        %v1075 = vmul.f32 %v761, %v787
        %v1076 = vmul.f32 %v761, %v788
        %v1077 = vmul.f32 %v761, %v789
        %v1078 = vmul.f32 %v761, %v790
        %v1079 = vmul.f32 %v761, %v791
        %v1080 = vmul.f32 %v761, %v792
        %v1081 = vmul.f32 %v761, %v793
        %v1082 = vmul.f32 %v761, %v794
        %v1083 = vmul.f32 %v761, %v795
        %v1084 = vmul.f32 %v761, %v796
        %v1085 = vmul.f32 %v761, %v797
        %v1086 = vmul.f32 %v761, %v798
        %v1087 = vmul.f32 %v761, %v799
        %v1088 = vmul.f32 %v761, %v800
        %v1089 = vmul.f32 %v761, %v801
        %v1090 = vmul.f32 %v761, %v802
        %v1091 = vmul.f32 %v761, %v803
        %v1092 = vmul.f32 %v761, %v804
        %v1093 = vmul.f32 %v761, %v805
        %v1094 = vmul.f32 %v761, %v806
        %v1095 = vmul.f32 %v761, %v807
        %v1096 = vmul.f32 %v761, %v808
        %v1097 = vmul.f32 %v761, %v809
        %v1098 = vmul.f32 %v761, %v810
        %v1099 = vmul.f32 %v761, %v811
        %v1100 = vmul.f32 %v761, %v812
        %v1101 = vmul.f32 %v761, %v813
        %v1102 = vmul.f32 %v761, %v814
        %v1103 = vmul.f32 %v765, %v783
        %v1104 = vmul.f32 %v765, %v784
        %v1105 = vmul.f32 %v765, %v785
        %v1106 = vmul.f32 %v765, %v786
        %v1107 = vmul.f32 %v765, %v787
        %v1108 = vmul.f32 %v765, %v788
        %v1109 = vmul.f32 %v765, %v789
        %v1110 = vmul.f32 %v765, %v790
        %v1111 = vmul.f32 %v765, %v791
        %v1112 = vmul.f32 %v765, %v792
        %v1113 = vmul.f32 %v765, %v793
        %v1114 = vmul.f32 %v765, %v794
        %v1115 = vmul.f32 %v765, %v795
        %v1116 = vmul.f32 %v765, %v796
        %v1117 = vmul.f32 %v765, %v797
        %v1118 = vmul.f32 %v765, %v798
        %v1119 = vmul.f32 %v765, %v799
        %v1120 = vmul.f32 %v765, %v800
        %v1121 = vmul.f32 %v765, %v801
        %v1122 = vmul.f32 %v765, %v802
        %v1123 = vmul.f32 %v765, %v803
        %v1124 = vmul.f32 %v765, %v804
        %v1125 = vmul.f32 %v765, %v805
        %v1126 = vmul.f32 %v765, %v806
        %v1127 = vmul.f32 %v765, %v807
        %v1128 = vmul.f32 %v765, %v808
        %v1129 = vmul.f32 %v765, %v809
        %v1130 = vmul.f32 %v765, %v810
        %v1131 = vmul.f32 %v765, %v811
        %v1132 = vmul.f32 %v765, %v812
        %v1133 = vmul.f32 %v765, %v813
        %v1134 = vmul.f32 %v765, %v814
        %v1135 = vmul.f32 %v769, %v783
        %v1136 = vmul.f32 %v769, %v784
        %v1137 = vmul.f32 %v769, %v785
        %v1138 = vmul.f32 %v769, %v786
        %v1139 = vmul.f32 %v769, %v787
        %v1140 = vmul.f32 %v769, %v788
        %v1141 = vmul.f32 %v769, %v789
        %v1142 = vmul.f32 %v769, %v790
        %v1143 = vmul.f32 %v769, %v791
        %v1144 = vmul.f32 %v769, %v792
        %v1145 = vmul.f32 %v769, %v793
        %v1146 = vmul.f32 %v769, %v794
        %v1147 = vmul.f32 %v769, %v795
        %v1148 = vmul.f32 %v769, %v796
        %v1149 = vmul.f32 %v769, %v797
        %v1150 = vmul.f32 %v769, %v798
        %v1151 = vmul.f32 %v769, %v799
        %v1152 = vmul.f32 %v769, %v800
        %v1153 = vmul.f32 %v769, %v801
        %v1154 = vmul.f32 %v769, %v802
        %v1155 = vmul.f32 %v769, %v803
        %v1156 = vmul.f32 %v769, %v804
        %v1157 = vmul.f32 %v769, %v805
        %v1158 = vmul.f32 %v769, %v806
        %v1159 = vmul.f32 %v769, %v807
        %v1160 = vmul.f32 %v769, %v808
        %v1161 = vmul.f32 %v769, %v809
        %v1162 = vmul.f32 %v769, %v810
        %v1163 = vmul.f32 %v769, %v811
        %v1164 = vmul.f32 %v769, %v812
        %v1165 = vmul.f32 %v769, %v813
        %v1166 = vmul.f32 %v769, %v814
        %v1167 = vmul.f32 %v773, %v783
        %v1168 = vmul.f32 %v773, %v784
        %v1169 = vmul.f32 %v773, %v785
        %v1170 = vmul.f32 %v773, %v786
        %v1171 = vmul.f32 %v773, %v787
        %v1172 = vmul.f32 %v773, %v788
        %v1173 = vmul.f32 %v773, %v789
        %v1174 = vmul.f32 %v773, %v790
        %v1175 = vmul.f32 %v773, %v791
        %v1176 = vmul.f32 %v773, %v792
        %v1177 = vmul.f32 %v773, %v793
        %v1178 = vmul.f32 %v773, %v794
        %v1179 = vmul.f32 %v773, %v795
        %v1180 = vmul.f32 %v773, %v796
        %v1181 = vmul.f32 %v773, %v797
        %v1182 = vmul.f32 %v773, %v798
        %v1183 = vmul.f32 %v773, %v799
        %v1184 = vmul.f32 %v773, %v800
        %v1185 = vmul.f32 %v773, %v801
        %v1186 = vmul.f32 %v773, %v802
        %v1187 = vmul.f32 %v773, %v803
        %v1188 = vmul.f32 %v773, %v804
        %v1189 = vmul.f32 %v773, %v805
        %v1190 = vmul.f32 %v773, %v806
        %v1191 = vmul.f32 %v773, %v807
        %v1192 = vmul.f32 %v773, %v808
        %v1193 = vmul.f32 %v773, %v809
        %v1194 = vmul.f32 %v773, %v810
        %v1195 = vmul.f32 %v773, %v811
        %v1196 = vmul.f32 %v773, %v812
        %v1197 = vmul.f32 %v773, %v813
        %v1198 = vmul.f32 %v773, %v814
        %v1199 = vmul.f32 %v777, %v783
        %v1200 = vmul.f32 %v777, %v784
        %v1201 = vmul.f32 %v777, %v785
        %v1202 = vmul.f32 %v777, %v786
        %v1203 = vmul.f32 %v777, %v787
        %v1204 = vmul.f32 %v777, %v788
        %v1205 = vmul.f32 %v777, %v789
        %v1206 = vmul.f32 %v777, %v790
        %v1207 = vmul.f32 %v777, %v791
        %v1208 = vmul.f32 %v777, %v792
        %v1209 = vmul.f32 %v777, %v793
        %v1210 = vmul.f32 %v777, %v794
        %v1211 = vmul.f32 %v777, %v795
        %v1212 = vmul.f32 %v777, %v796
        %v1213 = vmul.f32 %v777, %v797
        %v1214 = vmul.f32 %v777, %v798
        %v1215 = vmul.f32 %v777, %v799
        %v1216 = vmul.f32 %v777, %v800
        %v1217 = vmul.f32 %v777, %v801
        %v1218 = vmul.f32 %v777, %v802
        %v1219 = vmul.f32 %v777, %v803
        %v1220 = vmul.f32 %v777, %v804
        %v1221 = vmul.f32 %v777, %v805
        %v1222 = vmul.f32 %v777, %v806
        %v1223 = vmul.f32 %v777, %v807
        %v1224 = vmul.f32 %v777, %v808
        %v1225 = vmul.f32 %v777, %v809
        %v1226 = vmul.f32 %v777, %v810
        %v1227 = vmul.f32 %v777, %v811
        %v1228 = vmul.f32 %v777, %v812
        %v1229 = vmul.f32 %v777, %v813
        %v1230 = vmul.f32 %v777, %v814
        %v1231 = vadd.f32 %v347, %v847
        %v1232 = vadd.f32 %v348, %v848
        %v1233 = vadd.f32 %v349, %v849
        %v1234 = vadd.f32 %v350, %v850
        %v1235 = vadd.f32 %v351, %v851
        %v1236 = vadd.f32 %v352, %v852
        %v1237 = vadd.f32 %v353, %v853
        %v1238 = vadd.f32 %v354, %v854
        %v1239 = vadd.f32 %v355, %v855
        %v1240 = vadd.f32 %v356, %v856
        %v1241 = vadd.f32 %v357, %v857
        %v1242 = vadd.f32 %v358, %v858
        %v1243 = vadd.f32 %v359, %v859
        %v1244 = vadd.f32 %v360, %v860
        %v1245 = vadd.f32 %v361, %v861
        %v1246 = vadd.f32 %v362, %v862
        %v1247 = vadd.f32 %v363, %v863
        %v1248 = vadd.f32 %v364, %v864
        %v1249 = vadd.f32 %v365, %v865
        %v1250 = vadd.f32 %v366, %v866
        %v1251 = vadd.f32 %v367, %v867
        %v1252 = vadd.f32 %v368, %v868
        %v1253 = vadd.f32 %v369, %v869
        %v1254 = vadd.f32 %v370, %v870
        %v1255 = vadd.f32 %v371, %v871
        %v1256 = vadd.f32 %v372, %v872
        %v1257 = vadd.f32 %v373, %v873
        %v1258 = vadd.f32 %v374, %v874
        %v1259 = vadd.f32 %v375, %v875
        %v1260 = vadd.f32 %v376, %v876
        %v1261 = vadd.f32 %v377, %v877
        %v1262 = vadd.f32 %v378, %v878
        %v1263 = vadd.f32 %v379, %v879
        %v1264 = vadd.f32 %v380, %v880
        %v1265 = vadd.f32 %v381, %v881
        %v1266 = vadd.f32 %v382, %v882
        %v1267 = vadd.f32 %v383, %v883
        %v1268 = vadd.f32 %v384, %v884
        %v1269 = vadd.f32 %v385, %v885
        %v1270 = vadd.f32 %v386, %v886
        %v1271 = vadd.f32 %v387, %v887
        %v1272 = vadd.f32 %v388, %v888
        %v1273 = vadd.f32 %v389, %v889
        %v1274 = vadd.f32 %v390, %v890
        %v1275 = vadd.f32 %v391, %v891
        %v1276 = vadd.f32 %v392, %v892
        %v1277 = vadd.f32 %v393, %v893
        %v1278 = vadd.f32 %v394, %v894
        %v1279 = vadd.f32 %v395, %v895
        %v1280 = vadd.f32 %v396, %v896
        %v1281 = vadd.f32 %v397, %v897
        %v1282 = vadd.f32 %v398, %v898
        %v1283 = vadd.f32 %v399, %v899
        %v1284 = vadd.f32 %v400, %v900
        %v1285 = vadd.f32 %v401, %v901
        %v1286 = vadd.f32 %v402, %v902
        %v1287 = vadd.f32 %v403, %v903
        %v1288 = vadd.f32 %v404, %v904
        %v1289 = vadd.f32 %v405, %v905
        %v1290 = vadd.f32 %v406, %v906
        %v1291 = vadd.f32 %v407, %v907
        %v1292 = vadd.f32 %v408, %v908
        %v1293 = vadd.f32 %v409, %v909
        %v1294 = vadd.f32 %v410, %v910
        %v1295 = vadd.f32 %v411, %v911
        %v1296 = vadd.f32 %v412, %v912
        %v1297 = vadd.f32 %v413, %v913
        %v1298 = vadd.f32 %v414, %v914
        %v1299 = vadd.f32 %v415, %v915
        %v1300 = vadd.f32 %v416, %v916
        %v1301 = vadd.f32 %v417, %v917
        %v1302 = vadd.f32 %v418, %v918
        %v1303 = vadd.f32 %v419, %v919
        %v1304 = vadd.f32 %v420, %v920
        %v1305 = vadd.f32 %v421, %v921
        %v1306 = vadd.f32 %v422, %v922
        %v1307 = vadd.f32 %v423, %v923
        %v1308 = vadd.f32 %v424, %v924
        %v1309 = vadd.f32 %v425, %v925
        %v1310 = vadd.f32 %v426, %v926
        %v1311 = vadd.f32 %v427, %v927
        %v1312 = vadd.f32 %v428, %v928
        %v1313 = vadd.f32 %v429, %v929
        %v1314 = vadd.f32 %v430, %v930
        %v1315 = vadd.f32 %v431, %v931
        %v1316 = vadd.f32 %v432, %v932
        %v1317 = vadd.f32 %v433, %v933
        %v1318 = vadd.f32 %v434, %v934
        %v1319 = vadd.f32 %v435, %v935
        %v1320 = vadd.f32 %v436, %v936
        %v1321 = vadd.f32 %v437, %v937
        %v1322 = vadd.f32 %v438, %v938
        %v1323 = vadd.f32 %v439, %v939
        %v1324 = vadd.f32 %v440, %v940
        %v1325 = vadd.f32 %v441, %v941
        %v1326 = vadd.f32 %v442, %v942
        %v1327 = vadd.f32 %v443, %v943
        %v1328 = vadd.f32 %v444, %v944
        %v1329 = vadd.f32 %v445, %v945
        %v1330 = vadd.f32 %v446, %v946
        %v1331 = vadd.f32 %v447, %v947
        %v1332 = vadd.f32 %v448, %v948
        %v1333 = vadd.f32 %v449, %v949
        %v1334 = vadd.f32 %v450, %v950
        %v1335 = vadd.f32 %v451, %v951
        %v1336 = vadd.f32 %v452, %v952
        %v1337 = vadd.f32 %v453, %v953
        %v1338 = vadd.f32 %v454, %v954
        %v1339 = vadd.f32 %v455, %v955
        %v1340 = vadd.f32 %v456, %v956
        %v1341 = vadd.f32 %v457, %v957
        %v1342 = vadd.f32 %v458, %v958
        %v1343 = vadd.f32 %v459, %v959
        %v1344 = vadd.f32 %v460, %v960
        %v1345 = vadd.f32 %v461, %v961
        %v1346 = vadd.f32 %v462, %v962
        %v1347 = vadd.f32 %v463, %v963
        %v1348 = vadd.f32 %v464, %v964
        %v1349 = vadd.f32 %v465, %v965
        %v1350 = vadd.f32 %v466, %v966
        %v1351 = vadd.f32 %v467, %v967
        %v1352 = vadd.f32 %v468, %v968
        %v1353 = vadd.f32 %v469, %v969
        %v1354 = vadd.f32 %v470, %v970
        %v1355 = vadd.f32 %v471, %v971
        %v1356 = vadd.f32 %v472, %v972
        %v1357 = vadd.f32 %v473, %v973
        %v1358 = vadd.f32 %v474, %v974
        %v1359 = vadd.f32 %v475, %v975
        %v1360 = vadd.f32 %v476, %v976
        %v1361 = vadd.f32 %v477, %v977
        %v1362 = vadd.f32 %v478, %v978
        %v1363 = vadd.f32 %v479, %v979
        %v1364 = vadd.f32 %v480, %v980
        %v1365 = vadd.f32 %v481, %v981
        %v1366 = vadd.f32 %v482, %v982
        %v1367 = vadd.f32 %v483, %v983
        %v1368 = vadd.f32 %v484, %v984
        %v1369 = vadd.f32 %v485, %v985
        %v1370 = vadd.f32 %v486, %v986
        %v1371 = vadd.f32 %v487, %v987
        %v1372 = vadd.f32 %v488, %v988
        %v1373 = vadd.f32 %v489, %v989
        %v1374 = vadd.f32 %v490, %v990
        %v1375 = vadd.f32 %v491, %v991
        %v1376 = vadd.f32 %v492, %v992
        %v1377 = vadd.f32 %v493, %v993
        %v1378 = vadd.f32 %v494, %v994
        %v1379 = vadd.f32 %v495, %v995
        %v1380 = vadd.f32 %v496, %v996
        %v1381 = vadd.f32 %v497, %v997
        %v1382 = vadd.f32 %v498, %v998
        %v1383 = vadd.f32 %v499, %v999
        %v1384 = vadd.f32 %v500, %v1000
        %v1385 = vadd.f32 %v501, %v1001
        %v1386 = vadd.f32 %v502, %v1002
        %v1387 = vadd.f32 %v503, %v1003
        %v1388 = vadd.f32 %v504, %v1004
        %v1389 = vadd.f32 %v505, %v1005
        %v1390 = vadd.f32 %v506, %v1006
        %v1391 = vadd.f32 %v507, %v1007
        %v1392 = vadd.f32 %v508, %v1008
        %v1393 = vadd.f32 %v509, %v1009
        %v1394 = vadd.f32 %v510, %v1010
        %v1395 = vadd.f32 %v511, %v1011
        %v1396 = vadd.f32 %v512, %v1012
        %v1397 = vadd.f32 %v513, %v1013
        %v1398 = vadd.f32 %v514, %v1014
        %v1399 = vadd.f32 %v515, %v1015
        %v1400 = vadd.f32 %v516, %v1016
        %v1401 = vadd.f32 %v517, %v1017
        %v1402 = vadd.f32 %v518, %v1018
        %v1403 = vadd.f32 %v519, %v1019
        %v1404 = vadd.f32 %v520, %v1020
        %v1405 = vadd.f32 %v521, %v1021
        %v1406 = vadd.f32 %v522, %v1022
        %v1407 = vadd.f32 %v523, %v1023
        %v1408 = vadd.f32 %v524, %v1024
        %v1409 = vadd.f32 %v525, %v1025
        %v1410 = vadd.f32 %v526, %v1026
        %v1411 = vadd.f32 %v527, %v1027
        %v1412 = vadd.f32 %v528, %v1028
        %v1413 = vadd.f32 %v529, %v1029
        %v1414 = vadd.f32 %v530, %v1030
        %v1415 = vadd.f32 %v531, %v1031
        %v1416 = vadd.f32 %v532, %v1032
        %v1417 = vadd.f32 %v533, %v1033
        %v1418 = vadd.f32 %v534, %v1034
        %v1419 = vadd.f32 %v535, %v1035
        %v1420 = vadd.f32 %v536, %v1036
        %v1421 = vadd.f32 %v537, %v1037
        %v1422 = vadd.f32 %v538, %v1038
        %v1423 = vadd.f32 %v539, %v1039
        %v1424 = vadd.f32 %v540, %v1040
        %v1425 = vadd.f32 %v541, %v1041
        %v1426 = vadd.f32 %v542, %v1042
        %v1427 = vadd.f32 %v543, %v1043
        %v1428 = vadd.f32 %v544, %v1044
        %v1429 = vadd.f32 %v545, %v1045
        %v1430 = vadd.f32 %v546, %v1046
        %v1431 = vadd.f32 %v547, %v1047
        %v1432 = vadd.f32 %v548, %v1048
        %v1433 = vadd.f32 %v549, %v1049
        %v1434 = vadd.f32 %v550, %v1050
        %v1435 = vadd.f32 %v551, %v1051
        %v1436 = vadd.f32 %v552, %v1052
        %v1437 = vadd.f32 %v553, %v1053
        %v1438 = vadd.f32 %v554, %v1054
        %v1439 = vadd.f32 %v555, %v1055
        %v1440 = vadd.f32 %v556, %v1056
        %v1441 = vadd.f32 %v557, %v1057
        %v1442 = vadd.f32 %v558, %v1058
        %v1443 = vadd.f32 %v559, %v1059
        %v1444 = vadd.f32 %v560, %v1060
        %v1445 = vadd.f32 %v561, %v1061
        %v1446 = vadd.f32 %v562, %v1062
        %v1447 = vadd.f32 %v563, %v1063
        %v1448 = vadd.f32 %v564, %v1064
        %v1449 = vadd.f32 %v565, %v1065
        %v1450 = vadd.f32 %v566, %v1066
        %v1451 = vadd.f32 %v567, %v1067
        %v1452 = vadd.f32 %v568, %v1068
        %v1453 = vadd.f32 %v569, %v1069
        %v1454 = vadd.f32 %v570, %v1070
        %v1455 = vadd.f32 %v571, %v1071
        %v1456 = vadd.f32 %v572, %v1072
        %v1457 = vadd.f32 %v573, %v1073
        %v1458 = vadd.f32 %v574, %v1074
        %v1459 = vadd.f32 %v575, %v1075
        %v1460 = vadd.f32 %v576, %v1076
        %v1461 = vadd.f32 %v577, %v1077
        %v1462 = vadd.f32 %v578, %v1078
        %v1463 = vadd.f32 %v579, %v1079
        %v1464 = vadd.f32 %v580, %v1080
        %v1465 = vadd.f32 %v581, %v1081
        %v1466 = vadd.f32 %v582, %v1082
        %v1467 = vadd.f32 %v583, %v1083
        %v1468 = vadd.f32 %v584, %v1084
        %v1469 = vadd.f32 %v585, %v1085
        %v1470 = vadd.f32 %v586, %v1086
        %v1471 = vadd.f32 %v587, %v1087
        %v1472 = vadd.f32 %v588, %v1088
        %v1473 = vadd.f32 %v589, %v1089
        %v1474 = vadd.f32 %v590, %v1090
        %v1475 = vadd.f32 %v591, %v1091
        %v1476 = vadd.f32 %v592, %v1092
        %v1477 = vadd.f32 %v593, %v1093
        %v1478 = vadd.f32 %v594, %v1094
        %v1479 = vadd.f32 %v595, %v1095
        %v1480 = vadd.f32 %v596, %v1096
        %v1481 = vadd.f32 %v597, %v1097
        %v1482 = vadd.f32 %v598, %v1098
        %v1483 = vadd.f32 %v599, %v1099
        %v1484 = vadd.f32 %v600, %v1100
        %v1485 = vadd.f32 %v601, %v1101
        %v1486 = vadd.f32 %v602, %v1102
        %v1487 = vadd.f32 %v603, %v1103
        %v1488 = vadd.f32 %v604, %v1104
        %v1489 = vadd.f32 %v605, %v1105
        %v1490 = vadd.f32 %v606, %v1106
        %v1491 = vadd.f32 %v607, %v1107
        %v1492 = vadd.f32 %v608, %v1108
        %v1493 = vadd.f32 %v609, %v1109
        %v1494 = vadd.f32 %v610, %v1110
        %v1495 = vadd.f32 %v611, %v1111
        %v1496 = vadd.f32 %v612, %v1112
        %v1497 = vadd.f32 %v613, %v1113
        %v1498 = vadd.f32 %v614, %v1114
        %v1499 = vadd.f32 %v615, %v1115
        %v1500 = vadd.f32 %v616, %v1116
        %v1501 = vadd.f32 %v617, %v1117
        %v1502 = vadd.f32 %v618, %v1118
        %v1503 = vadd.f32 %v619, %v1119
        %v1504 = vadd.f32 %v620, %v1120
        %v1505 = vadd.f32 %v621, %v1121
        %v1506 = vadd.f32 %v622, %v1122
        %v1507 = vadd.f32 %v623, %v1123
        %v1508 = vadd.f32 %v624, %v1124
        %v1509 = vadd.f32 %v625, %v1125
        %v1510 = vadd.f32 %v626, %v1126
        %v1511 = vadd.f32 %v627, %v1127
        %v1512 = vadd.f32 %v628, %v1128
        %v1513 = vadd.f32 %v629, %v1129
        %v1514 = vadd.f32 %v630, %v1130
        %v1515 = vadd.f32 %v631, %v1131
        %v1516 = vadd.f32 %v632, %v1132
        %v1517 = vadd.f32 %v633, %v1133
        %v1518 = vadd.f32 %v634, %v1134
        %v1519 = vadd.f32 %v635, %v1135
        %v1520 = vadd.f32 %v636, %v1136
        %v1521 = vadd.f32 %v637, %v1137
        %v1522 = vadd.f32 %v638, %v1138
        %v1523 = vadd.f32 %v639, %v1139
        %v1524 = vadd.f32 %v640, %v1140
        %v1525 = vadd.f32 %v641, %v1141
        %v1526 = vadd.f32 %v642, %v1142
        %v1527 = vadd.f32 %v643, %v1143
        %v1528 = vadd.f32 %v644, %v1144
        %v1529 = vadd.f32 %v645, %v1145
        %v1530 = vadd.f32 %v646, %v1146
        %v1531 = vadd.f32 %v647, %v1147
        %v1532 = vadd.f32 %v648, %v1148
        %v1533 = vadd.f32 %v649, %v1149
        %v1534 = vadd.f32 %v650, %v1150
        %v1535 = vadd.f32 %v651, %v1151
        %v1536 = vadd.f32 %v652, %v1152
        %v1537 = vadd.f32 %v653, %v1153
        %v1538 = vadd.f32 %v654, %v1154
        %v1539 = vadd.f32 %v655, %v1155
        %v1540 = vadd.f32 %v656, %v1156
        %v1541 = vadd.f32 %v657, %v1157
        %v1542 = vadd.f32 %v658, %v1158
        %v1543 = vadd.f32 %v659, %v1159
        %v1544 = vadd.f32 %v660, %v1160
        %v1545 = vadd.f32 %v661, %v1161
        %v1546 = vadd.f32 %v662, %v1162
        %v1547 = vadd.f32 %v663, %v1163
        %v1548 = vadd.f32 %v664, %v1164
        %v1549 = vadd.f32 %v665, %v1165
        %v1550 = vadd.f32 %v666, %v1166
        %v1551 = vadd.f32 %v667, %v1167
        %v1552 = vadd.f32 %v668, %v1168
        %v1553 = vadd.f32 %v669, %v1169
        %v1554 = vadd.f32 %v670, %v1170
        %v1555 = vadd.f32 %v671, %v1171
        %v1556 = vadd.f32 %v672, %v1172
        %v1557 = vadd.f32 %v673, %v1173
        %v1558 = vadd.f32 %v674, %v1174
        %v1559 = vadd.f32 %v675, %v1175
        %v1560 = vadd.f32 %v676, %v1176
        %v1561 = vadd.f32 %v677, %v1177
        %v1562 = vadd.f32 %v678, %v1178
        %v1563 = vadd.f32 %v679, %v1179
        %v1564 = vadd.f32 %v680, %v1180
        %v1565 = vadd.f32 %v681, %v1181
        %v1566 = vadd.f32 %v682, %v1182
        %v1567 = vadd.f32 %v683, %v1183
        %v1568 = vadd.f32 %v684, %v1184
        %v1569 = vadd.f32 %v685, %v1185
        %v1570 = vadd.f32 %v686, %v1186
        %v1571 = vadd.f32 %v687, %v1187
        %v1572 = vadd.f32 %v688, %v1188
        %v1573 = vadd.f32 %v689, %v1189
        %v1574 = vadd.f32 %v690, %v1190
        %v1575 = vadd.f32 %v691, %v1191
        %v1576 = vadd.f32 %v692, %v1192
        %v1577 = vadd.f32 %v693, %v1193
        %v1578 = vadd.f32 %v694, %v1194
        %v1579 = vadd.f32 %v695, %v1195
        %v1580 = vadd.f32 %v696, %v1196
        %v1581 = vadd.f32 %v697, %v1197
        %v1582 = vadd.f32 %v698, %v1198
        %v1583 = vadd.f32 %v699, %v1199
        %v1584 = vadd.f32 %v700, %v1200
        %v1585 = vadd.f32 %v701, %v1201
        %v1586 = vadd.f32 %v702, %v1202
        %v1587 = vadd.f32 %v703, %v1203
        %v1588 = vadd.f32 %v704, %v1204
        %v1589 = vadd.f32 %v705, %v1205
        %v1590 = vadd.f32 %v706, %v1206
        %v1591 = vadd.f32 %v707, %v1207
        %v1592 = vadd.f32 %v708, %v1208
        %v1593 = vadd.f32 %v709, %v1209
        %v1594 = vadd.f32 %v710, %v1210
        %v1595 = vadd.f32 %v711, %v1211
        %v1596 = vadd.f32 %v712, %v1212
        %v1597 = vadd.f32 %v713, %v1213
        %v1598 = vadd.f32 %v714, %v1214
        %v1599 = vadd.f32 %v715, %v1215
        %v1600 = vadd.f32 %v716, %v1216
        %v1601 = vadd.f32 %v717, %v1217
        %v1602 = vadd.f32 %v718, %v1218
        %v1603 = vadd.f32 %v719, %v1219
        %v1604 = vadd.f32 %v720, %v1220
        %v1605 = vadd.f32 %v721, %v1221
        %v1606 = vadd.f32 %v722, %v1222
        %v1607 = vadd.f32 %v723, %v1223
        %v1608 = vadd.f32 %v724, %v1224
        %v1609 = vadd.f32 %v725, %v1225
        %v1610 = vadd.f32 %v726, %v1226
        %v1611 = vadd.f32 %v727, %v1227
        %v1612 = vadd.f32 %v728, %v1228
        %v1613 = vadd.f32 %v729, %v1229
        %v1614 = vadd.f32 %v730, %v1230
        %v1619 = vperm.slane %v212, 0
        %v1620 = vperm.slane %v212, 1
        %v1621 = vperm.slane %v212, 2
        %v1622 = vperm.slane %v212, 3
        %v1623 = vperm.slane %v212, 4
        %v1624 = vperm.slane %v212, 5
        %v1625 = vperm.slane %v212, 6
        %v1626 = vperm.slane %v212, 7
        %v1627 = vperm.slane %v214, 0
        %v1628 = vperm.slane %v214, 1
        %v1629 = vperm.slane %v214, 2
        %v1630 = vperm.slane %v214, 3
        %v1631 = vperm.slane %v214, 4
        %v1632 = vperm.slane %v214, 5
        %v1633 = vperm.slane %v214, 6
        %v1634 = vperm.slane %v214, 7
        %v1635 = vperm.slane %v216, 0
        %v1636 = vperm.slane %v216, 1
        %v1637 = vperm.slane %v216, 2
        %v1638 = vperm.slane %v216, 3
        %v1639 = vperm.slane %v216, 4
        %v1640 = vperm.slane %v216, 5
        %v1641 = vperm.slane %v216, 6
        %v1642 = vperm.slane %v216, 7
        %v1643 = vperm.slane %v218, 0
        %v1644 = vperm.slane %v218, 1
        %v1645 = vperm.slane %v218, 2
        %v1646 = vperm.slane %v218, 3
        %v1647 = vperm.slane %v218, 4
        %v1648 = vperm.slane %v218, 5
        %v1649 = vperm.slane %v218, 6
        %v1650 = vperm.slane %v218, 7
        %v1683 = vadd.f32 %v1231, %v1619
        %v1684 = vadd.f32 %v1232, %v1620
        %v1685 = vadd.f32 %v1233, %v1621
        %v1686 = vadd.f32 %v1234, %v1622
        %v1687 = vadd.f32 %v1235, %v1623
        %v1688 = vadd.f32 %v1236, %v1624
        %v1689 = vadd.f32 %v1237, %v1625
        %v1690 = vadd.f32 %v1238, %v1626
        %v1691 = vadd.f32 %v1239, %v1627
        %v1692 = vadd.f32 %v1240, %v1628
        %v1693 = vadd.f32 %v1241, %v1629
        %v1694 = vadd.f32 %v1242, %v1630
        %v1695 = vadd.f32 %v1243, %v1631
        %v1696 = vadd.f32 %v1244, %v1632
        %v1697 = vadd.f32 %v1245, %v1633
        %v1698 = vadd.f32 %v1246, %v1634
        %v1699 = vadd.f32 %v1247, %v1635
        %v1700 = vadd.f32 %v1248, %v1636
        %v1701 = vadd.f32 %v1249, %v1637
        %v1702 = vadd.f32 %v1250, %v1638
        %v1703 = vadd.f32 %v1251, %v1639
        %v1704 = vadd.f32 %v1252, %v1640
        %v1705 = vadd.f32 %v1253, %v1641
        %v1706 = vadd.f32 %v1254, %v1642
        %v1707 = vadd.f32 %v1255, %v1643
        %v1708 = vadd.f32 %v1256, %v1644
        %v1709 = vadd.f32 %v1257, %v1645
        %v1710 = vadd.f32 %v1258, %v1646
        %v1711 = vadd.f32 %v1259, %v1647
        %v1712 = vadd.f32 %v1260, %v1648
        %v1713 = vadd.f32 %v1261, %v1649
        %v1714 = vadd.f32 %v1262, %v1650
        %v1715 = vadd.f32 %v1263, %v1619
        %v1716 = vadd.f32 %v1264, %v1620
        %v1717 = vadd.f32 %v1265, %v1621
        %v1718 = vadd.f32 %v1266, %v1622
        %v1719 = vadd.f32 %v1267, %v1623
        %v1720 = vadd.f32 %v1268, %v1624
        %v1721 = vadd.f32 %v1269, %v1625
        %v1722 = vadd.f32 %v1270, %v1626
        %v1723 = vadd.f32 %v1271, %v1627
        %v1724 = vadd.f32 %v1272, %v1628
        %v1725 = vadd.f32 %v1273, %v1629
        %v1726 = vadd.f32 %v1274, %v1630
        %v1727 = vadd.f32 %v1275, %v1631
        %v1728 = vadd.f32 %v1276, %v1632
        %v1729 = vadd.f32 %v1277, %v1633
        %v1730 = vadd.f32 %v1278, %v1634
        %v1731 = vadd.f32 %v1279, %v1635
        %v1732 = vadd.f32 %v1280, %v1636
        %v1733 = vadd.f32 %v1281, %v1637
        %v1734 = vadd.f32 %v1282, %v1638
        %v1735 = vadd.f32 %v1283, %v1639
        %v1736 = vadd.f32 %v1284, %v1640
        %v1737 = vadd.f32 %v1285, %v1641
        %v1738 = vadd.f32 %v1286, %v1642
        %v1739 = vadd.f32 %v1287, %v1643
        %v1740 = vadd.f32 %v1288, %v1644
        %v1741 = vadd.f32 %v1289, %v1645
        %v1742 = vadd.f32 %v1290, %v1646
        %v1743 = vadd.f32 %v1291, %v1647
        %v1744 = vadd.f32 %v1292, %v1648
        %v1745 = vadd.f32 %v1293, %v1649
        %v1746 = vadd.f32 %v1294, %v1650
        %v1747 = vadd.f32 %v1295, %v1619
        %v1748 = vadd.f32 %v1296, %v1620
        %v1749 = vadd.f32 %v1297, %v1621
        %v1750 = vadd.f32 %v1298, %v1622
        %v1751 = vadd.f32 %v1299, %v1623
        %v1752 = vadd.f32 %v1300, %v1624
        %v1753 = vadd.f32 %v1301, %v1625
        %v1754 = vadd.f32 %v1302, %v1626
        %v1755 = vadd.f32 %v1303, %v1627
        %v1756 = vadd.f32 %v1304, %v1628
        %v1757 = vadd.f32 %v1305, %v1629
        %v1758 = vadd.f32 %v1306, %v1630
        %v1759 = vadd.f32 %v1307, %v1631
        %v1760 = vadd.f32 %v1308, %v1632
        %v1761 = vadd.f32 %v1309, %v1633
        %v1762 = vadd.f32 %v1310, %v1634
        %v1763 = vadd.f32 %v1311, %v1635
        %v1764 = vadd.f32 %v1312, %v1636
        %v1765 = vadd.f32 %v1313, %v1637
        %v1766 = vadd.f32 %v1314, %v1638
        %v1767 = vadd.f32 %v1315, %v1639
        %v1768 = vadd.f32 %v1316, %v1640
        %v1769 = vadd.f32 %v1317, %v1641
        %v1770 = vadd.f32 %v1318, %v1642
        %v1771 = vadd.f32 %v1319, %v1643
        %v1772 = vadd.f32 %v1320, %v1644
        %v1773 = vadd.f32 %v1321, %v1645
        %v1774 = vadd.f32 %v1322, %v1646
        %v1775 = vadd.f32 %v1323, %v1647
        %v1776 = vadd.f32 %v1324, %v1648
        %v1777 = vadd.f32 %v1325, %v1649
        %v1778 = vadd.f32 %v1326, %v1650
        %v1779 = vadd.f32 %v1327, %v1619
        %v1780 = vadd.f32 %v1328, %v1620
        %v1781 = vadd.f32 %v1329, %v1621
        %v1782 = vadd.f32 %v1330, %v1622
        %v1783 = vadd.f32 %v1331, %v1623
        %v1784 = vadd.f32 %v1332, %v1624
        %v1785 = vadd.f32 %v1333, %v1625
        %v1786 = vadd.f32 %v1334, %v1626
        %v1787 = vadd.f32 %v1335, %v1627
        %v1788 = vadd.f32 %v1336, %v1628
        %v1789 = vadd.f32 %v1337, %v1629
        %v1790 = vadd.f32 %v1338, %v1630
        %v1791 = vadd.f32 %v1339, %v1631
        %v1792 = vadd.f32 %v1340, %v1632
        %v1793 = vadd.f32 %v1341, %v1633
        %v1794 = vadd.f32 %v1342, %v1634
        %v1795 = vadd.f32 %v1343, %v1635
        %v1796 = vadd.f32 %v1344, %v1636
        %v1797 = vadd.f32 %v1345, %v1637
        %v1798 = vadd.f32 %v1346, %v1638
        %v1799 = vadd.f32 %v1347, %v1639
        %v1800 = vadd.f32 %v1348, %v1640
        %v1801 = vadd.f32 %v1349, %v1641
        %v1802 = vadd.f32 %v1350, %v1642
        %v1803 = vadd.f32 %v1351, %v1643
        %v1804 = vadd.f32 %v1352, %v1644
        %v1805 = vadd.f32 %v1353, %v1645
        %v1806 = vadd.f32 %v1354, %v1646
        %v1807 = vadd.f32 %v1355, %v1647
        %v1808 = vadd.f32 %v1356, %v1648
        %v1809 = vadd.f32 %v1357, %v1649
        %v1810 = vadd.f32 %v1358, %v1650
        %v1811 = vadd.f32 %v1359, %v1619
        %v1812 = vadd.f32 %v1360, %v1620
        %v1813 = vadd.f32 %v1361, %v1621
        %v1814 = vadd.f32 %v1362, %v1622
        %v1815 = vadd.f32 %v1363, %v1623
        %v1816 = vadd.f32 %v1364, %v1624
        %v1817 = vadd.f32 %v1365, %v1625
        %v1818 = vadd.f32 %v1366, %v1626
        %v1819 = vadd.f32 %v1367, %v1627
        %v1820 = vadd.f32 %v1368, %v1628
        %v1821 = vadd.f32 %v1369, %v1629
        %v1822 = vadd.f32 %v1370, %v1630
        %v1823 = vadd.f32 %v1371, %v1631
        %v1824 = vadd.f32 %v1372, %v1632
        %v1825 = vadd.f32 %v1373, %v1633
        %v1826 = vadd.f32 %v1374, %v1634
        %v1827 = vadd.f32 %v1375, %v1635
        %v1828 = vadd.f32 %v1376, %v1636
        %v1829 = vadd.f32 %v1377, %v1637
        %v1830 = vadd.f32 %v1378, %v1638
        %v1831 = vadd.f32 %v1379, %v1639
        %v1832 = vadd.f32 %v1380, %v1640
        %v1833 = vadd.f32 %v1381, %v1641
        %v1834 = vadd.f32 %v1382, %v1642
        %v1835 = vadd.f32 %v1383, %v1643
        %v1836 = vadd.f32 %v1384, %v1644
        %v1837 = vadd.f32 %v1385, %v1645
        %v1838 = vadd.f32 %v1386, %v1646
        %v1839 = vadd.f32 %v1387, %v1647
        %v1840 = vadd.f32 %v1388, %v1648
        %v1841 = vadd.f32 %v1389, %v1649
        %v1842 = vadd.f32 %v1390, %v1650
        %v1843 = vadd.f32 %v1391, %v1619
        %v1844 = vadd.f32 %v1392, %v1620
        %v1845 = vadd.f32 %v1393, %v1621
        %v1846 = vadd.f32 %v1394, %v1622
        %v1847 = vadd.f32 %v1395, %v1623
        %v1848 = vadd.f32 %v1396, %v1624
        %v1849 = vadd.f32 %v1397, %v1625
        %v1850 = vadd.f32 %v1398, %v1626
        %v1851 = vadd.f32 %v1399, %v1627
        %v1852 = vadd.f32 %v1400, %v1628
        %v1853 = vadd.f32 %v1401, %v1629
        %v1854 = vadd.f32 %v1402, %v1630
        %v1855 = vadd.f32 %v1403, %v1631
        %v1856 = vadd.f32 %v1404, %v1632
        %v1857 = vadd.f32 %v1405, %v1633
        %v1858 = vadd.f32 %v1406, %v1634
        %v1859 = vadd.f32 %v1407, %v1635
        %v1860 = vadd.f32 %v1408, %v1636
        %v1861 = vadd.f32 %v1409, %v1637
        %v1862 = vadd.f32 %v1410, %v1638
        %v1863 = vadd.f32 %v1411, %v1639
        %v1864 = vadd.f32 %v1412, %v1640
        %v1865 = vadd.f32 %v1413, %v1641
        %v1866 = vadd.f32 %v1414, %v1642
        %v1867 = vadd.f32 %v1415, %v1643
        %v1868 = vadd.f32 %v1416, %v1644
        %v1869 = vadd.f32 %v1417, %v1645
        %v1870 = vadd.f32 %v1418, %v1646
        %v1871 = vadd.f32 %v1419, %v1647
        %v1872 = vadd.f32 %v1420, %v1648
        %v1873 = vadd.f32 %v1421, %v1649
        %v1874 = vadd.f32 %v1422, %v1650
        %v1875 = vadd.f32 %v1423, %v1619
        %v1876 = vadd.f32 %v1424, %v1620
        %v1877 = vadd.f32 %v1425, %v1621
        %v1878 = vadd.f32 %v1426, %v1622
        %v1879 = vadd.f32 %v1427, %v1623
        %v1880 = vadd.f32 %v1428, %v1624
        %v1881 = vadd.f32 %v1429, %v1625
        %v1882 = vadd.f32 %v1430, %v1626
        %v1883 = vadd.f32 %v1431, %v1627
        %v1884 = vadd.f32 %v1432, %v1628
        %v1885 = vadd.f32 %v1433, %v1629
        %v1886 = vadd.f32 %v1434, %v1630
        %v1887 = vadd.f32 %v1435, %v1631
        %v1888 = vadd.f32 %v1436, %v1632
        %v1889 = vadd.f32 %v1437, %v1633
        %v1890 = vadd.f32 %v1438, %v1634
        %v1891 = vadd.f32 %v1439, %v1635
        %v1892 = vadd.f32 %v1440, %v1636
        %v1893 = vadd.f32 %v1441, %v1637
        %v1894 = vadd.f32 %v1442, %v1638
        %v1895 = vadd.f32 %v1443, %v1639
        %v1896 = vadd.f32 %v1444, %v1640
        %v1897 = vadd.f32 %v1445, %v1641
        %v1898 = vadd.f32 %v1446, %v1642
        %v1899 = vadd.f32 %v1447, %v1643
        %v1900 = vadd.f32 %v1448, %v1644
        %v1901 = vadd.f32 %v1449, %v1645
        %v1902 = vadd.f32 %v1450, %v1646
        %v1903 = vadd.f32 %v1451, %v1647
        %v1904 = vadd.f32 %v1452, %v1648
        %v1905 = vadd.f32 %v1453, %v1649
        %v1906 = vadd.f32 %v1454, %v1650
        %v1907 = vadd.f32 %v1455, %v1619
        %v1908 = vadd.f32 %v1456, %v1620
        %v1909 = vadd.f32 %v1457, %v1621
        %v1910 = vadd.f32 %v1458, %v1622
        %v1911 = vadd.f32 %v1459, %v1623
        %v1912 = vadd.f32 %v1460, %v1624
        %v1913 = vadd.f32 %v1461, %v1625
        %v1914 = vadd.f32 %v1462, %v1626
        %v1915 = vadd.f32 %v1463, %v1627
        %v1916 = vadd.f32 %v1464, %v1628
        %v1917 = vadd.f32 %v1465, %v1629
        %v1918 = vadd.f32 %v1466, %v1630
        %v1919 = vadd.f32 %v1467, %v1631
        %v1920 = vadd.f32 %v1468, %v1632
        %v1921 = vadd.f32 %v1469, %v1633
        %v1922 = vadd.f32 %v1470, %v1634
        %v1923 = vadd.f32 %v1471, %v1635
        %v1924 = vadd.f32 %v1472, %v1636
        %v1925 = vadd.f32 %v1473, %v1637
        %v1926 = vadd.f32 %v1474, %v1638
        %v1927 = vadd.f32 %v1475, %v1639
        %v1928 = vadd.f32 %v1476, %v1640
        %v1929 = vadd.f32 %v1477, %v1641
        %v1930 = vadd.f32 %v1478, %v1642
        %v1931 = vadd.f32 %v1479, %v1643
        %v1932 = vadd.f32 %v1480, %v1644
        %v1933 = vadd.f32 %v1481, %v1645
        %v1934 = vadd.f32 %v1482, %v1646
        %v1935 = vadd.f32 %v1483, %v1647
        %v1936 = vadd.f32 %v1484, %v1648
        %v1937 = vadd.f32 %v1485, %v1649
        %v1938 = vadd.f32 %v1486, %v1650
        %v1939 = vadd.f32 %v1487, %v1619
        %v1940 = vadd.f32 %v1488, %v1620
        %v1941 = vadd.f32 %v1489, %v1621
        %v1942 = vadd.f32 %v1490, %v1622
        %v1943 = vadd.f32 %v1491, %v1623
        %v1944 = vadd.f32 %v1492, %v1624
        %v1945 = vadd.f32 %v1493, %v1625
        %v1946 = vadd.f32 %v1494, %v1626
        %v1947 = vadd.f32 %v1495, %v1627
        %v1948 = vadd.f32 %v1496, %v1628
        %v1949 = vadd.f32 %v1497, %v1629
        %v1950 = vadd.f32 %v1498, %v1630
        %v1951 = vadd.f32 %v1499, %v1631
        %v1952 = vadd.f32 %v1500, %v1632
        %v1953 = vadd.f32 %v1501, %v1633
        %v1954 = vadd.f32 %v1502, %v1634
        %v1955 = vadd.f32 %v1503, %v1635
        %v1956 = vadd.f32 %v1504, %v1636
        %v1957 = vadd.f32 %v1505, %v1637
        %v1958 = vadd.f32 %v1506, %v1638
        %v1959 = vadd.f32 %v1507, %v1639
        %v1960 = vadd.f32 %v1508, %v1640
        %v1961 = vadd.f32 %v1509, %v1641
        %v1962 = vadd.f32 %v1510, %v1642
        %v1963 = vadd.f32 %v1511, %v1643
        %v1964 = vadd.f32 %v1512, %v1644
        %v1965 = vadd.f32 %v1513, %v1645
        %v1966 = vadd.f32 %v1514, %v1646
        %v1967 = vadd.f32 %v1515, %v1647
        %v1968 = vadd.f32 %v1516, %v1648
        %v1969 = vadd.f32 %v1517, %v1649
        %v1970 = vadd.f32 %v1518, %v1650
        %v1971 = vadd.f32 %v1519, %v1619
        %v1972 = vadd.f32 %v1520, %v1620
        %v1973 = vadd.f32 %v1521, %v1621
        %v1974 = vadd.f32 %v1522, %v1622
        %v1975 = vadd.f32 %v1523, %v1623
        %v1976 = vadd.f32 %v1524, %v1624
        %v1977 = vadd.f32 %v1525, %v1625
        %v1978 = vadd.f32 %v1526, %v1626
        %v1979 = vadd.f32 %v1527, %v1627
        %v1980 = vadd.f32 %v1528, %v1628
        %v1981 = vadd.f32 %v1529, %v1629
        %v1982 = vadd.f32 %v1530, %v1630
        %v1983 = vadd.f32 %v1531, %v1631
        %v1984 = vadd.f32 %v1532, %v1632
        %v1985 = vadd.f32 %v1533, %v1633
        %v1986 = vadd.f32 %v1534, %v1634
        %v1987 = vadd.f32 %v1535, %v1635
        %v1988 = vadd.f32 %v1536, %v1636
        %v1989 = vadd.f32 %v1537, %v1637
        %v1990 = vadd.f32 %v1538, %v1638
        %v1991 = vadd.f32 %v1539, %v1639
        %v1992 = vadd.f32 %v1540, %v1640
        %v1993 = vadd.f32 %v1541, %v1641
        %v1994 = vadd.f32 %v1542, %v1642
        %v1995 = vadd.f32 %v1543, %v1643
        %v1996 = vadd.f32 %v1544, %v1644
        %v1997 = vadd.f32 %v1545, %v1645
        %v1998 = vadd.f32 %v1546, %v1646
        %v1999 = vadd.f32 %v1547, %v1647
        %v2000 = vadd.f32 %v1548, %v1648
        %v2001 = vadd.f32 %v1549, %v1649
        %v2002 = vadd.f32 %v1550, %v1650
        %v2003 = vadd.f32 %v1551, %v1619
        %v2004 = vadd.f32 %v1552, %v1620
        %v2005 = vadd.f32 %v1553, %v1621
        %v2006 = vadd.f32 %v1554, %v1622
        %v2007 = vadd.f32 %v1555, %v1623
        %v2008 = vadd.f32 %v1556, %v1624
        %v2009 = vadd.f32 %v1557, %v1625
        %v2010 = vadd.f32 %v1558, %v1626
        %v2011 = vadd.f32 %v1559, %v1627
        %v2012 = vadd.f32 %v1560, %v1628
        %v2013 = vadd.f32 %v1561, %v1629
        %v2014 = vadd.f32 %v1562, %v1630
        %v2015 = vadd.f32 %v1563, %v1631
        %v2016 = vadd.f32 %v1564, %v1632
        %v2017 = vadd.f32 %v1565, %v1633
        %v2018 = vadd.f32 %v1566, %v1634
        %v2019 = vadd.f32 %v1567, %v1635
        %v2020 = vadd.f32 %v1568, %v1636
        %v2021 = vadd.f32 %v1569, %v1637
        %v2022 = vadd.f32 %v1570, %v1638
        %v2023 = vadd.f32 %v1571, %v1639
        %v2024 = vadd.f32 %v1572, %v1640
        %v2025 = vadd.f32 %v1573, %v1641
        %v2026 = vadd.f32 %v1574, %v1642
        %v2027 = vadd.f32 %v1575, %v1643
        %v2028 = vadd.f32 %v1576, %v1644
        %v2029 = vadd.f32 %v1577, %v1645
        %v2030 = vadd.f32 %v1578, %v1646
        %v2031 = vadd.f32 %v1579, %v1647
        %v2032 = vadd.f32 %v1580, %v1648
        %v2033 = vadd.f32 %v1581, %v1649
        %v2034 = vadd.f32 %v1582, %v1650
        %v2035 = vadd.f32 %v1583, %v1619
        %v2036 = vadd.f32 %v1584, %v1620
        %v2037 = vadd.f32 %v1585, %v1621
        %v2038 = vadd.f32 %v1586, %v1622
        %v2039 = vadd.f32 %v1587, %v1623
        %v2040 = vadd.f32 %v1588, %v1624
        %v2041 = vadd.f32 %v1589, %v1625
        %v2042 = vadd.f32 %v1590, %v1626
        %v2043 = vadd.f32 %v1591, %v1627
        %v2044 = vadd.f32 %v1592, %v1628
        %v2045 = vadd.f32 %v1593, %v1629
        %v2046 = vadd.f32 %v1594, %v1630
        %v2047 = vadd.f32 %v1595, %v1631
        %v2048 = vadd.f32 %v1596, %v1632
        %v2049 = vadd.f32 %v1597, %v1633
        %v2050 = vadd.f32 %v1598, %v1634
        %v2051 = vadd.f32 %v1599, %v1635
        %v2052 = vadd.f32 %v1600, %v1636
        %v2053 = vadd.f32 %v1601, %v1637
        %v2054 = vadd.f32 %v1602, %v1638
        %v2055 = vadd.f32 %v1603, %v1639
        %v2056 = vadd.f32 %v1604, %v1640
        %v2057 = vadd.f32 %v1605, %v1641
        %v2058 = vadd.f32 %v1606, %v1642
        %v2059 = vadd.f32 %v1607, %v1643
        %v2060 = vadd.f32 %v1608, %v1644
        %v2061 = vadd.f32 %v1609, %v1645
        %v2062 = vadd.f32 %v1610, %v1646
        %v2063 = vadd.f32 %v1611, %v1647
        %v2064 = vadd.f32 %v1612, %v1648
        %v2065 = vadd.f32 %v1613, %v1649
        %v2066 = vadd.f32 %v1614, %v1650
        %2067 = vst [vmem:[%s174] sm:$0xff] %v1683
        %2068 = vst [vmem:[%s174 + $0x8] sm:$0xff] %v1684
        %2069 = vst [vmem:[%s174 + $0x10] sm:$0xff] %v1685
        %2070 = vst [vmem:[%s174 + $0x18] sm:$0xff] %v1686
        %2071 = vst [vmem:[%s174 + $0x20] sm:$0xff] %v1687
        %2072 = vst [vmem:[%s174 + $0x28] sm:$0xff] %v1688
        %2073 = vst [vmem:[%s174 + $0x30] sm:$0xff] %v1689
        %2074 = vst [vmem:[%s174 + $0x38] sm:$0xff] %v1690
        %2075 = vst [vmem:[%s174 + $0x40] sm:$0xff] %v1691
        %2076 = vst [vmem:[%s174 + $0x48] sm:$0xff] %v1692
        %2077 = vst [vmem:[%s174 + $0x50] sm:$0xff] %v1693
        %2078 = vst [vmem:[%s174 + $0x58] sm:$0xff] %v1694
        %2079 = vst [vmem:[%s174 + $0x60] sm:$0xff] %v1695
        %2080 = vst [vmem:[%s174 + $0x68] sm:$0xff] %v1696
        %2081 = vst [vmem:[%s174 + $0x70] sm:$0xff] %v1697
        %2082 = vst [vmem:[%s174 + $0x78] sm:$0xff] %v1698
        %2083 = vst [vmem:[%s174 + $0x80] sm:$0xff] %v1699
        %2084 = vst [vmem:[%s174 + $0x88] sm:$0xff] %v1700
        %2085 = vst [vmem:[%s174 + $0x90] sm:$0xff] %v1701
        %2086 = vst [vmem:[%s174 + $0x98] sm:$0xff] %v1702
        %2087 = vst [vmem:[%s174 + $0xa0] sm:$0xff] %v1703
        %2088 = vst [vmem:[%s174 + $0xa8] sm:$0xff] %v1704
        %2089 = vst [vmem:[%s174 + $0xb0] sm:$0xff] %v1705
        %2090 = vst [vmem:[%s174 + $0xb8] sm:$0xff] %v1706
        %2091 = vst [vmem:[%s174 + $0xc0] sm:$0xff] %v1707
        %2092 = vst [vmem:[%s174 + $0xc8] sm:$0xff] %v1708
        %2093 = vst [vmem:[%s174 + $0xd0] sm:$0xff] %v1709
        %2094 = vst [vmem:[%s174 + $0xd8] sm:$0xff] %v1710
        %2095 = vst [vmem:[%s174 + $0xe0] sm:$0xff] %v1711
        %2096 = vst [vmem:[%s174 + $0xe8] sm:$0xff] %v1712
        %2097 = vst [vmem:[%s174 + $0xf0] sm:$0xff] %v1713
        %2098 = vst [vmem:[%s174 + $0xf8] sm:$0xff] %v1714
        %2099 = vst [vmem:[%s174 + $0x100] sm:$0xff] %v1715
        %2100 = vst [vmem:[%s174 + $0x108] sm:$0xff] %v1716
        %2101 = vst [vmem:[%s174 + $0x110] sm:$0xff] %v1717
        %2102 = vst [vmem:[%s174 + $0x118] sm:$0xff] %v1718
        %2103 = vst [vmem:[%s174 + $0x120] sm:$0xff] %v1719
        %2104 = vst [vmem:[%s174 + $0x128] sm:$0xff] %v1720
        %2105 = vst [vmem:[%s174 + $0x130] sm:$0xff] %v1721
        %2106 = vst [vmem:[%s174 + $0x138] sm:$0xff] %v1722
        %2107 = vst [vmem:[%s174 + $0x140] sm:$0xff] %v1723
        %2108 = vst [vmem:[%s174 + $0x148] sm:$0xff] %v1724
        %2109 = vst [vmem:[%s174 + $0x150] sm:$0xff] %v1725
        %2110 = vst [vmem:[%s174 + $0x158] sm:$0xff] %v1726
        %2111 = vst [vmem:[%s174 + $0x160] sm:$0xff] %v1727
        %2112 = vst [vmem:[%s174 + $0x168] sm:$0xff] %v1728
        %2113 = vst [vmem:[%s174 + $0x170] sm:$0xff] %v1729
        %2114 = vst [vmem:[%s174 + $0x178] sm:$0xff] %v1730
        %2115 = vst [vmem:[%s174 + $0x180] sm:$0xff] %v1731
        %2116 = vst [vmem:[%s174 + $0x188] sm:$0xff] %v1732
        %2117 = vst [vmem:[%s174 + $0x190] sm:$0xff] %v1733
        %2118 = vst [vmem:[%s174 + $0x198] sm:$0xff] %v1734
        %2119 = vst [vmem:[%s174 + $0x1a0] sm:$0xff] %v1735
        %2120 = vst [vmem:[%s174 + $0x1a8] sm:$0xff] %v1736
        %2121 = vst [vmem:[%s174 + $0x1b0] sm:$0xff] %v1737
        %2122 = vst [vmem:[%s174 + $0x1b8] sm:$0xff] %v1738
        %2123 = vst [vmem:[%s174 + $0x1c0] sm:$0xff] %v1739
        %2124 = vst [vmem:[%s174 + $0x1c8] sm:$0xff] %v1740
        %2125 = vst [vmem:[%s174 + $0x1d0] sm:$0xff] %v1741
        %2126 = vst [vmem:[%s174 + $0x1d8] sm:$0xff] %v1742
        %2127 = vst [vmem:[%s174 + $0x1e0] sm:$0xff] %v1743
        %2128 = vst [vmem:[%s174 + $0x1e8] sm:$0xff] %v1744
        %2129 = vst [vmem:[%s174 + $0x1f0] sm:$0xff] %v1745
        %2130 = vst [vmem:[%s174 + $0x1f8] sm:$0xff] %v1746
        %2131 = vst [vmem:[%s174 + $0x200] sm:$0xff] %v1747
        %2132 = vst [vmem:[%s174 + $0x208] sm:$0xff] %v1748
        %2133 = vst [vmem:[%s174 + $0x210] sm:$0xff] %v1749
        %2134 = vst [vmem:[%s174 + $0x218] sm:$0xff] %v1750
        %2135 = vst [vmem:[%s174 + $0x220] sm:$0xff] %v1751
        %2136 = vst [vmem:[%s174 + $0x228] sm:$0xff] %v1752
        %2137 = vst [vmem:[%s174 + $0x230] sm:$0xff] %v1753
        %2138 = vst [vmem:[%s174 + $0x238] sm:$0xff] %v1754
        %2139 = vst [vmem:[%s174 + $0x240] sm:$0xff] %v1755
        %2140 = vst [vmem:[%s174 + $0x248] sm:$0xff] %v1756
        %2141 = vst [vmem:[%s174 + $0x250] sm:$0xff] %v1757
        %2142 = vst [vmem:[%s174 + $0x258] sm:$0xff] %v1758
        %2143 = vst [vmem:[%s174 + $0x260] sm:$0xff] %v1759
        %2144 = vst [vmem:[%s174 + $0x268] sm:$0xff] %v1760
        %2145 = vst [vmem:[%s174 + $0x270] sm:$0xff] %v1761
        %2146 = vst [vmem:[%s174 + $0x278] sm:$0xff] %v1762
        %2147 = vst [vmem:[%s174 + $0x280] sm:$0xff] %v1763
        %2148 = vst [vmem:[%s174 + $0x288] sm:$0xff] %v1764
        %2149 = vst [vmem:[%s174 + $0x290] sm:$0xff] %v1765
        %2150 = vst [vmem:[%s174 + $0x298] sm:$0xff] %v1766
        %2151 = vst [vmem:[%s174 + $0x2a0] sm:$0xff] %v1767
        %2152 = vst [vmem:[%s174 + $0x2a8] sm:$0xff] %v1768
        %2153 = vst [vmem:[%s174 + $0x2b0] sm:$0xff] %v1769
        %2154 = vst [vmem:[%s174 + $0x2b8] sm:$0xff] %v1770
        %2155 = vst [vmem:[%s174 + $0x2c0] sm:$0xff] %v1771
        %2156 = vst [vmem:[%s174 + $0x2c8] sm:$0xff] %v1772
        %2157 = vst [vmem:[%s174 + $0x2d0] sm:$0xff] %v1773
        %2158 = vst [vmem:[%s174 + $0x2d8] sm:$0xff] %v1774
        %2159 = vst [vmem:[%s174 + $0x2e0] sm:$0xff] %v1775
        %2160 = vst [vmem:[%s174 + $0x2e8] sm:$0xff] %v1776
        %2161 = vst [vmem:[%s174 + $0x2f0] sm:$0xff] %v1777
        %2162 = vst [vmem:[%s174 + $0x2f8] sm:$0xff] %v1778
        %2163 = vst [vmem:[%s174 + $0x300] sm:$0xff] %v1779
        %2164 = vst [vmem:[%s174 + $0x308] sm:$0xff] %v1780
        %2165 = vst [vmem:[%s174 + $0x310] sm:$0xff] %v1781
        %2166 = vst [vmem:[%s174 + $0x318] sm:$0xff] %v1782
        %2167 = vst [vmem:[%s174 + $0x320] sm:$0xff] %v1783
        %2168 = vst [vmem:[%s174 + $0x328] sm:$0xff] %v1784
        %2169 = vst [vmem:[%s174 + $0x330] sm:$0xff] %v1785
        %2170 = vst [vmem:[%s174 + $0x338] sm:$0xff] %v1786
        %2171 = vst [vmem:[%s174 + $0x340] sm:$0xff] %v1787
        %2172 = vst [vmem:[%s174 + $0x348] sm:$0xff] %v1788
        %2173 = vst [vmem:[%s174 + $0x350] sm:$0xff] %v1789
        %2174 = vst [vmem:[%s174 + $0x358] sm:$0xff] %v1790
        %2175 = vst [vmem:[%s174 + $0x360] sm:$0xff] %v1791
        %2176 = vst [vmem:[%s174 + $0x368] sm:$0xff] %v1792
        %2177 = vst [vmem:[%s174 + $0x370] sm:$0xff] %v1793
        %2178 = vst [vmem:[%s174 + $0x378] sm:$0xff] %v1794
        %2179 = vst [vmem:[%s174 + $0x380] sm:$0xff] %v1795
        %2180 = vst [vmem:[%s174 + $0x388] sm:$0xff] %v1796
        %2181 = vst [vmem:[%s174 + $0x390] sm:$0xff] %v1797
        %2182 = vst [vmem:[%s174 + $0x398] sm:$0xff] %v1798
        %2183 = vst [vmem:[%s174 + $0x3a0] sm:$0xff] %v1799
        %2184 = vst [vmem:[%s174 + $0x3a8] sm:$0xff] %v1800
        %2185 = vst [vmem:[%s174 + $0x3b0] sm:$0xff] %v1801
        %2186 = vst [vmem:[%s174 + $0x3b8] sm:$0xff] %v1802
        %2187 = vst [vmem:[%s174 + $0x3c0] sm:$0xff] %v1803
        %2188 = vst [vmem:[%s174 + $0x3c8] sm:$0xff] %v1804
        %2189 = vst [vmem:[%s174 + $0x3d0] sm:$0xff] %v1805
        %2190 = vst [vmem:[%s174 + $0x3d8] sm:$0xff] %v1806
        %2191 = vst [vmem:[%s174 + $0x3e0] sm:$0xff] %v1807
        %2192 = vst [vmem:[%s174 + $0x3e8] sm:$0xff] %v1808
        %2193 = vst [vmem:[%s174 + $0x3f0] sm:$0xff] %v1809
        %2194 = vst [vmem:[%s174 + $0x3f8] sm:$0xff] %v1810
        %2195 = vst [vmem:[%s174 + $0x400] sm:$0xff] %v1811
        %2196 = vst [vmem:[%s174 + $0x408] sm:$0xff] %v1812
        %2197 = vst [vmem:[%s174 + $0x410] sm:$0xff] %v1813
        %2198 = vst [vmem:[%s174 + $0x418] sm:$0xff] %v1814
        %2199 = vst [vmem:[%s174 + $0x420] sm:$0xff] %v1815
        %2200 = vst [vmem:[%s174 + $0x428] sm:$0xff] %v1816
        %2201 = vst [vmem:[%s174 + $0x430] sm:$0xff] %v1817
        %2202 = vst [vmem:[%s174 + $0x438] sm:$0xff] %v1818
        %2203 = vst [vmem:[%s174 + $0x440] sm:$0xff] %v1819
        %2204 = vst [vmem:[%s174 + $0x448] sm:$0xff] %v1820
        %2205 = vst [vmem:[%s174 + $0x450] sm:$0xff] %v1821
        %2206 = vst [vmem:[%s174 + $0x458] sm:$0xff] %v1822
        %2207 = vst [vmem:[%s174 + $0x460] sm:$0xff] %v1823
        %2208 = vst [vmem:[%s174 + $0x468] sm:$0xff] %v1824
        %2209 = vst [vmem:[%s174 + $0x470] sm:$0xff] %v1825
        %2210 = vst [vmem:[%s174 + $0x478] sm:$0xff] %v1826
        %2211 = vst [vmem:[%s174 + $0x480] sm:$0xff] %v1827
        %2212 = vst [vmem:[%s174 + $0x488] sm:$0xff] %v1828
        %2213 = vst [vmem:[%s174 + $0x490] sm:$0xff] %v1829
        %2214 = vst [vmem:[%s174 + $0x498] sm:$0xff] %v1830
        %2215 = vst [vmem:[%s174 + $0x4a0] sm:$0xff] %v1831
        %2216 = vst [vmem:[%s174 + $0x4a8] sm:$0xff] %v1832
        %2217 = vst [vmem:[%s174 + $0x4b0] sm:$0xff] %v1833
        %2218 = vst [vmem:[%s174 + $0x4b8] sm:$0xff] %v1834
        %2219 = vst [vmem:[%s174 + $0x4c0] sm:$0xff] %v1835
        %2220 = vst [vmem:[%s174 + $0x4c8] sm:$0xff] %v1836
        %2221 = vst [vmem:[%s174 + $0x4d0] sm:$0xff] %v1837
        %2222 = vst [vmem:[%s174 + $0x4d8] sm:$0xff] %v1838
        %2223 = vst [vmem:[%s174 + $0x4e0] sm:$0xff] %v1839
        %2224 = vst [vmem:[%s174 + $0x4e8] sm:$0xff] %v1840
        %2225 = vst [vmem:[%s174 + $0x4f0] sm:$0xff] %v1841
        %2226 = vst [vmem:[%s174 + $0x4f8] sm:$0xff] %v1842
        %2227 = vst [vmem:[%s174 + $0x500] sm:$0xff] %v1843
        %2228 = vst [vmem:[%s174 + $0x508] sm:$0xff] %v1844
        %2229 = vst [vmem:[%s174 + $0x510] sm:$0xff] %v1845
        %2230 = vst [vmem:[%s174 + $0x518] sm:$0xff] %v1846
        %2231 = vst [vmem:[%s174 + $0x520] sm:$0xff] %v1847
        %2232 = vst [vmem:[%s174 + $0x528] sm:$0xff] %v1848
        %2233 = vst [vmem:[%s174 + $0x530] sm:$0xff] %v1849
        %2234 = vst [vmem:[%s174 + $0x538] sm:$0xff] %v1850
        %2235 = vst [vmem:[%s174 + $0x540] sm:$0xff] %v1851
        %2236 = vst [vmem:[%s174 + $0x548] sm:$0xff] %v1852
        %2237 = vst [vmem:[%s174 + $0x550] sm:$0xff] %v1853
        %2238 = vst [vmem:[%s174 + $0x558] sm:$0xff] %v1854
        %2239 = vst [vmem:[%s174 + $0x560] sm:$0xff] %v1855
        %2240 = vst [vmem:[%s174 + $0x568] sm:$0xff] %v1856
        %2241 = vst [vmem:[%s174 + $0x570] sm:$0xff] %v1857
        %2242 = vst [vmem:[%s174 + $0x578] sm:$0xff] %v1858
        %2243 = vst [vmem:[%s174 + $0x580] sm:$0xff] %v1859
        %2244 = vst [vmem:[%s174 + $0x588] sm:$0xff] %v1860
        %2245 = vst [vmem:[%s174 + $0x590] sm:$0xff] %v1861
        %2246 = vst [vmem:[%s174 + $0x598] sm:$0xff] %v1862
        %2247 = vst [vmem:[%s174 + $0x5a0] sm:$0xff] %v1863
        %2248 = vst [vmem:[%s174 + $0x5a8] sm:$0xff] %v1864
        %2249 = vst [vmem:[%s174 + $0x5b0] sm:$0xff] %v1865
        %2250 = vst [vmem:[%s174 + $0x5b8] sm:$0xff] %v1866
        %2251 = vst [vmem:[%s174 + $0x5c0] sm:$0xff] %v1867
        %2252 = vst [vmem:[%s174 + $0x5c8] sm:$0xff] %v1868
        %2253 = vst [vmem:[%s174 + $0x5d0] sm:$0xff] %v1869
        %2254 = vst [vmem:[%s174 + $0x5d8] sm:$0xff] %v1870
        %2255 = vst [vmem:[%s174 + $0x5e0] sm:$0xff] %v1871
        %2256 = vst [vmem:[%s174 + $0x5e8] sm:$0xff] %v1872
        %2257 = vst [vmem:[%s174 + $0x5f0] sm:$0xff] %v1873
        %2258 = vst [vmem:[%s174 + $0x5f8] sm:$0xff] %v1874
        %2259 = vst [vmem:[%s174 + $0x600] sm:$0xff] %v1875
        %2260 = vst [vmem:[%s174 + $0x608] sm:$0xff] %v1876
        %2261 = vst [vmem:[%s174 + $0x610] sm:$0xff] %v1877
        %2262 = vst [vmem:[%s174 + $0x618] sm:$0xff] %v1878
        %2263 = vst [vmem:[%s174 + $0x620] sm:$0xff] %v1879
        %2264 = vst [vmem:[%s174 + $0x628] sm:$0xff] %v1880
        %2265 = vst [vmem:[%s174 + $0x630] sm:$0xff] %v1881
        %2266 = vst [vmem:[%s174 + $0x638] sm:$0xff] %v1882
        %2267 = vst [vmem:[%s174 + $0x640] sm:$0xff] %v1883
        %2268 = vst [vmem:[%s174 + $0x648] sm:$0xff] %v1884
        %2269 = vst [vmem:[%s174 + $0x650] sm:$0xff] %v1885
        %2270 = vst [vmem:[%s174 + $0x658] sm:$0xff] %v1886
        %2271 = vst [vmem:[%s174 + $0x660] sm:$0xff] %v1887
        %2272 = vst [vmem:[%s174 + $0x668] sm:$0xff] %v1888
        %2273 = vst [vmem:[%s174 + $0x670] sm:$0xff] %v1889
        %2274 = vst [vmem:[%s174 + $0x678] sm:$0xff] %v1890
        %2275 = vst [vmem:[%s174 + $0x680] sm:$0xff] %v1891
        %2276 = vst [vmem:[%s174 + $0x688] sm:$0xff] %v1892
        %2277 = vst [vmem:[%s174 + $0x690] sm:$0xff] %v1893
        %2278 = vst [vmem:[%s174 + $0x698] sm:$0xff] %v1894
        %2279 = vst [vmem:[%s174 + $0x6a0] sm:$0xff] %v1895
        %2280 = vst [vmem:[%s174 + $0x6a8] sm:$0xff] %v1896
        %2281 = vst [vmem:[%s174 + $0x6b0] sm:$0xff] %v1897
        %2282 = vst [vmem:[%s174 + $0x6b8] sm:$0xff] %v1898
        %2283 = vst [vmem:[%s174 + $0x6c0] sm:$0xff] %v1899
        %2284 = vst [vmem:[%s174 + $0x6c8] sm:$0xff] %v1900
        %2285 = vst [vmem:[%s174 + $0x6d0] sm:$0xff] %v1901
        %2286 = vst [vmem:[%s174 + $0x6d8] sm:$0xff] %v1902
        %2287 = vst [vmem:[%s174 + $0x6e0] sm:$0xff] %v1903
        %2288 = vst [vmem:[%s174 + $0x6e8] sm:$0xff] %v1904
        %2289 = vst [vmem:[%s174 + $0x6f0] sm:$0xff] %v1905
        %2290 = vst [vmem:[%s174 + $0x6f8] sm:$0xff] %v1906
        %2291 = vst [vmem:[%s174 + $0x700] sm:$0xff] %v1907
        %2292 = vst [vmem:[%s174 + $0x708] sm:$0xff] %v1908
        %2293 = vst [vmem:[%s174 + $0x710] sm:$0xff] %v1909
        %2294 = vst [vmem:[%s174 + $0x718] sm:$0xff] %v1910
        %2295 = vst [vmem:[%s174 + $0x720] sm:$0xff] %v1911
        %2296 = vst [vmem:[%s174 + $0x728] sm:$0xff] %v1912
        %2297 = vst [vmem:[%s174 + $0x730] sm:$0xff] %v1913
        %2298 = vst [vmem:[%s174 + $0x738] sm:$0xff] %v1914
        %2299 = vst [vmem:[%s174 + $0x740] sm:$0xff] %v1915
        %2300 = vst [vmem:[%s174 + $0x748] sm:$0xff] %v1916
        %2301 = vst [vmem:[%s174 + $0x750] sm:$0xff] %v1917
        %2302 = vst [vmem:[%s174 + $0x758] sm:$0xff] %v1918
        %2303 = vst [vmem:[%s174 + $0x760] sm:$0xff] %v1919
        %2304 = vst [vmem:[%s174 + $0x768] sm:$0xff] %v1920
        %2305 = vst [vmem:[%s174 + $0x770] sm:$0xff] %v1921
        %2306 = vst [vmem:[%s174 + $0x778] sm:$0xff] %v1922
        %2307 = vst [vmem:[%s174 + $0x780] sm:$0xff] %v1923
        %2308 = vst [vmem:[%s174 + $0x788] sm:$0xff] %v1924
        %2309 = vst [vmem:[%s174 + $0x790] sm:$0xff] %v1925
        %2310 = vst [vmem:[%s174 + $0x798] sm:$0xff] %v1926
        %2311 = vst [vmem:[%s174 + $0x7a0] sm:$0xff] %v1927
        %2312 = vst [vmem:[%s174 + $0x7a8] sm:$0xff] %v1928
        %2313 = vst [vmem:[%s174 + $0x7b0] sm:$0xff] %v1929
        %2314 = vst [vmem:[%s174 + $0x7b8] sm:$0xff] %v1930
        %2315 = vst [vmem:[%s174 + $0x7c0] sm:$0xff] %v1931
        %2316 = vst [vmem:[%s174 + $0x7c8] sm:$0xff] %v1932
        %2317 = vst [vmem:[%s174 + $0x7d0] sm:$0xff] %v1933
        %2318 = vst [vmem:[%s174 + $0x7d8] sm:$0xff] %v1934
        %2319 = vst [vmem:[%s174 + $0x7e0] sm:$0xff] %v1935
        %2320 = vst [vmem:[%s174 + $0x7e8] sm:$0xff] %v1936
        %2321 = vst [vmem:[%s174 + $0x7f0] sm:$0xff] %v1937
        %2322 = vst [vmem:[%s174 + $0x7f8] sm:$0xff] %v1938
        %2323 = vst [vmem:[%s174 + $0x800] sm:$0xff] %v1939
        %2324 = vst [vmem:[%s174 + $0x808] sm:$0xff] %v1940
        %2325 = vst [vmem:[%s174 + $0x810] sm:$0xff] %v1941
        %2326 = vst [vmem:[%s174 + $0x818] sm:$0xff] %v1942
        %2327 = vst [vmem:[%s174 + $0x820] sm:$0xff] %v1943
        %2328 = vst [vmem:[%s174 + $0x828] sm:$0xff] %v1944
        %2329 = vst [vmem:[%s174 + $0x830] sm:$0xff] %v1945
        %2330 = vst [vmem:[%s174 + $0x838] sm:$0xff] %v1946
        %2331 = vst [vmem:[%s174 + $0x840] sm:$0xff] %v1947
        %2332 = vst [vmem:[%s174 + $0x848] sm:$0xff] %v1948
        %2333 = vst [vmem:[%s174 + $0x850] sm:$0xff] %v1949
        %2334 = vst [vmem:[%s174 + $0x858] sm:$0xff] %v1950
        %2335 = vst [vmem:[%s174 + $0x860] sm:$0xff] %v1951
        %2336 = vst [vmem:[%s174 + $0x868] sm:$0xff] %v1952
        %2337 = vst [vmem:[%s174 + $0x870] sm:$0xff] %v1953
        %2338 = vst [vmem:[%s174 + $0x878] sm:$0xff] %v1954
        %2339 = vst [vmem:[%s174 + $0x880] sm:$0xff] %v1955
        %2340 = vst [vmem:[%s174 + $0x888] sm:$0xff] %v1956
        %2341 = vst [vmem:[%s174 + $0x890] sm:$0xff] %v1957
        %2342 = vst [vmem:[%s174 + $0x898] sm:$0xff] %v1958
        %2343 = vst [vmem:[%s174 + $0x8a0] sm:$0xff] %v1959
        %2344 = vst [vmem:[%s174 + $0x8a8] sm:$0xff] %v1960
        %2345 = vst [vmem:[%s174 + $0x8b0] sm:$0xff] %v1961
        %2346 = vst [vmem:[%s174 + $0x8b8] sm:$0xff] %v1962
        %2347 = vst [vmem:[%s174 + $0x8c0] sm:$0xff] %v1963
        %2348 = vst [vmem:[%s174 + $0x8c8] sm:$0xff] %v1964
        %2349 = vst [vmem:[%s174 + $0x8d0] sm:$0xff] %v1965
        %2350 = vst [vmem:[%s174 + $0x8d8] sm:$0xff] %v1966
        %2351 = vst [vmem:[%s174 + $0x8e0] sm:$0xff] %v1967
        %2352 = vst [vmem:[%s174 + $0x8e8] sm:$0xff] %v1968
        %2353 = vst [vmem:[%s174 + $0x8f0] sm:$0xff] %v1969
        %2354 = vst [vmem:[%s174 + $0x8f8] sm:$0xff] %v1970
        %2355 = vst [vmem:[%s174 + $0x900] sm:$0xff] %v1971
        %2356 = vst [vmem:[%s174 + $0x908] sm:$0xff] %v1972
        %2357 = vst [vmem:[%s174 + $0x910] sm:$0xff] %v1973
        %2358 = vst [vmem:[%s174 + $0x918] sm:$0xff] %v1974
        %2359 = vst [vmem:[%s174 + $0x920] sm:$0xff] %v1975
        %2360 = vst [vmem:[%s174 + $0x928] sm:$0xff] %v1976
        %2361 = vst [vmem:[%s174 + $0x930] sm:$0xff] %v1977
        %2362 = vst [vmem:[%s174 + $0x938] sm:$0xff] %v1978
        %2363 = vst [vmem:[%s174 + $0x940] sm:$0xff] %v1979
        %2364 = vst [vmem:[%s174 + $0x948] sm:$0xff] %v1980
        %2365 = vst [vmem:[%s174 + $0x950] sm:$0xff] %v1981
        %2366 = vst [vmem:[%s174 + $0x958] sm:$0xff] %v1982
        %2367 = vst [vmem:[%s174 + $0x960] sm:$0xff] %v1983
        %2368 = vst [vmem:[%s174 + $0x968] sm:$0xff] %v1984
        %2369 = vst [vmem:[%s174 + $0x970] sm:$0xff] %v1985
        %2370 = vst [vmem:[%s174 + $0x978] sm:$0xff] %v1986
        %2371 = vst [vmem:[%s174 + $0x980] sm:$0xff] %v1987
        %2372 = vst [vmem:[%s174 + $0x988] sm:$0xff] %v1988
        %2373 = vst [vmem:[%s174 + $0x990] sm:$0xff] %v1989
        %2374 = vst [vmem:[%s174 + $0x998] sm:$0xff] %v1990
        %2375 = vst [vmem:[%s174 + $0x9a0] sm:$0xff] %v1991
        %2376 = vst [vmem:[%s174 + $0x9a8] sm:$0xff] %v1992
        %2377 = vst [vmem:[%s174 + $0x9b0] sm:$0xff] %v1993
        %2378 = vst [vmem:[%s174 + $0x9b8] sm:$0xff] %v1994
        %2379 = vst [vmem:[%s174 + $0x9c0] sm:$0xff] %v1995
        %2380 = vst [vmem:[%s174 + $0x9c8] sm:$0xff] %v1996
        %2381 = vst [vmem:[%s174 + $0x9d0] sm:$0xff] %v1997
        %2382 = vst [vmem:[%s174 + $0x9d8] sm:$0xff] %v1998
        %2383 = vst [vmem:[%s174 + $0x9e0] sm:$0xff] %v1999
        %2384 = vst [vmem:[%s174 + $0x9e8] sm:$0xff] %v2000
        %2385 = vst [vmem:[%s174 + $0x9f0] sm:$0xff] %v2001
        %2386 = vst [vmem:[%s174 + $0x9f8] sm:$0xff] %v2002
        %2387 = vst [vmem:[%s174 + $0xa00] sm:$0xff] %v2003
        %2388 = vst [vmem:[%s174 + $0xa08] sm:$0xff] %v2004
        %2389 = vst [vmem:[%s174 + $0xa10] sm:$0xff] %v2005
        %2390 = vst [vmem:[%s174 + $0xa18] sm:$0xff] %v2006
        %2391 = vst [vmem:[%s174 + $0xa20] sm:$0xff] %v2007
        %2392 = vst [vmem:[%s174 + $0xa28] sm:$0xff] %v2008
        %2393 = vst [vmem:[%s174 + $0xa30] sm:$0xff] %v2009
        %2394 = vst [vmem:[%s174 + $0xa38] sm:$0xff] %v2010
        %2395 = vst [vmem:[%s174 + $0xa40] sm:$0xff] %v2011
        %2396 = vst [vmem:[%s174 + $0xa48] sm:$0xff] %v2012
        %2397 = vst [vmem:[%s174 + $0xa50] sm:$0xff] %v2013
        %2398 = vst [vmem:[%s174 + $0xa58] sm:$0xff] %v2014
        %2399 = vst [vmem:[%s174 + $0xa60] sm:$0xff] %v2015
        %2400 = vst [vmem:[%s174 + $0xa68] sm:$0xff] %v2016
        %2401 = vst [vmem:[%s174 + $0xa70] sm:$0xff] %v2017
        %2402 = vst [vmem:[%s174 + $0xa78] sm:$0xff] %v2018
        %2403 = vst [vmem:[%s174 + $0xa80] sm:$0xff] %v2019
        %2404 = vst [vmem:[%s174 + $0xa88] sm:$0xff] %v2020
        %2405 = vst [vmem:[%s174 + $0xa90] sm:$0xff] %v2021
        %2406 = vst [vmem:[%s174 + $0xa98] sm:$0xff] %v2022
        %2407 = vst [vmem:[%s174 + $0xaa0] sm:$0xff] %v2023
        %2408 = vst [vmem:[%s174 + $0xaa8] sm:$0xff] %v2024
        %2409 = vst [vmem:[%s174 + $0xab0] sm:$0xff] %v2025
        %2410 = vst [vmem:[%s174 + $0xab8] sm:$0xff] %v2026
        %2411 = vst [vmem:[%s174 + $0xac0] sm:$0xff] %v2027
        %2412 = vst [vmem:[%s174 + $0xac8] sm:$0xff] %v2028
        %2413 = vst [vmem:[%s174 + $0xad0] sm:$0xff] %v2029
        %2414 = vst [vmem:[%s174 + $0xad8] sm:$0xff] %v2030
        %2415 = vst [vmem:[%s174 + $0xae0] sm:$0xff] %v2031
        %2416 = vst [vmem:[%s174 + $0xae8] sm:$0xff] %v2032
        %2417 = vst [vmem:[%s174 + $0xaf0] sm:$0xff] %v2033
        %2418 = vst [vmem:[%s174 + $0xaf8] sm:$0xff] %v2034
        %2419 = vst [vmem:[%s174 + $0xb00] sm:$0xff] %v2035
        %2420 = vst [vmem:[%s174 + $0xb08] sm:$0xff] %v2036
        %2421 = vst [vmem:[%s174 + $0xb10] sm:$0xff] %v2037
        %2422 = vst [vmem:[%s174 + $0xb18] sm:$0xff] %v2038
        %2423 = vst [vmem:[%s174 + $0xb20] sm:$0xff] %v2039
        %2424 = vst [vmem:[%s174 + $0xb28] sm:$0xff] %v2040
        %2425 = vst [vmem:[%s174 + $0xb30] sm:$0xff] %v2041
        %2426 = vst [vmem:[%s174 + $0xb38] sm:$0xff] %v2042
        %2427 = vst [vmem:[%s174 + $0xb40] sm:$0xff] %v2043
        %2428 = vst [vmem:[%s174 + $0xb48] sm:$0xff] %v2044
        %2429 = vst [vmem:[%s174 + $0xb50] sm:$0xff] %v2045
        %2430 = vst [vmem:[%s174 + $0xb58] sm:$0xff] %v2046
        %2431 = vst [vmem:[%s174 + $0xb60] sm:$0xff] %v2047
        %2432 = vst [vmem:[%s174 + $0xb68] sm:$0xff] %v2048
        %2433 = vst [vmem:[%s174 + $0xb70] sm:$0xff] %v2049
        %2434 = vst [vmem:[%s174 + $0xb78] sm:$0xff] %v2050
        %2435 = vst [vmem:[%s174 + $0xb80] sm:$0xff] %v2051
        %2436 = vst [vmem:[%s174 + $0xb88] sm:$0xff] %v2052
        %2437 = vst [vmem:[%s174 + $0xb90] sm:$0xff] %v2053
        %2438 = vst [vmem:[%s174 + $0xb98] sm:$0xff] %v2054
        %2439 = vst [vmem:[%s174 + $0xba0] sm:$0xff] %v2055
        %2440 = vst [vmem:[%s174 + $0xba8] sm:$0xff] %v2056
        %2441 = vst [vmem:[%s174 + $0xbb0] sm:$0xff] %v2057
        %2442 = vst [vmem:[%s174 + $0xbb8] sm:$0xff] %v2058
        %2443 = vst [vmem:[%s174 + $0xbc0] sm:$0xff] %v2059
        %2444 = vst [vmem:[%s174 + $0xbc8] sm:$0xff] %v2060
        %2445 = vst [vmem:[%s174 + $0xbd0] sm:$0xff] %v2061
        %2446 = vst [vmem:[%s174 + $0xbd8] sm:$0xff] %v2062
        %2447 = vst [vmem:[%s174 + $0xbe0] sm:$0xff] %v2063
        %2448 = vst [vmem:[%s174 + $0xbe8] sm:$0xff] %v2064
        %2449 = vst [vmem:[%s174 + $0xbf0] sm:$0xff] %v2065
        %2450 = vst [vmem:[%s174 + $0xbf8] sm:$0xff] %v2066
        %s2451 = sand.u32 %s91, 1
        %s2452 = scalar_lea.sflag [#allocation4], %s2451
        %s2453 = sand.u32 %s91, 1
        %s2454 = smul.addr %s2453, 3072
        %s2455 = scalar_lea.vmem [#allocation5], %s2454
        // Predicated region
        $region33: #{tpu_custom_call.1} parent=27 // pred_check
          %p2456 = pneg %p101
        $region34: #{tpu_custom_call.1} parent=27 // pred_check_branch
          %2458 = sbr.rel (%p2456) target = $region36
        $region35: #{tpu_custom_call.1} parent=27 // pred_region
          %s2459 = smul.u32 12, %s21
          %s2460 = smul.u32 32, %s22
          %2462 = vsyncadd %s2452, 0
          %s2463 = smul.addr %s2459, 32
          %s2464 = sadd.s32 %s2460, %s2463
          %s2465 = smul.addr %s2464, 8
          %s2466 = scalar_lea.hbm %s2, %s2465
          %s2467 = sshll.u32 %s2455, 4
          %s2468 = int_to_ptr.vmem [resolvable:$true] %s2467
          %s2469 = sshll.u32 %s2466, 4
          %s2470 = int_to_ptr.hbm [resolvable:$true] %s2469
          %2475 = dma.vmem_to_hbm [thread:$0]  %s2468, 49152, %s2470, %s2452, 4096, 4096, 256
        $region36: #{tpu_custom_call.1} parent=27 // pred_fallthru
          _
      $region28: #{tpu_custom_call.1} parent=5 // pred_fallthru
        _
      %p2476 = scmp.le.s32.totalorder 2, %s12
      // Predicated region
      $region37: #{tpu_custom_call.1} parent=5 // pred_check
        %p2477 = pneg %p2476
      $region38: #{tpu_custom_call.1} parent=5 // pred_check_branch
        %2479 = sbr.rel (%p2477) target = $region40
      $region39: #{tpu_custom_call.1} parent=5 // pred_region
        %s2480 = ssub.s32 %s12, 2
        // Predicated region
        $region41: #{tpu_custom_call.1} parent=39 // pred_check
          %p2481 = pneg %p107
        $region42: #{tpu_custom_call.1} parent=39 // pred_check_branch
          %2483 = sbr.rel (%p2481) target = $region44
        $region43: #{tpu_custom_call.1} parent=39 // pred_region
          %s2484 = sand.u32 %s92, 1
          %s2485 = scalar_lea.sflag [#allocation4], %s2484
          %s2486 = sand.u32 %s92, 1
          %s2487 = smul.addr %s2486, 3072
          %s2488 = scalar_lea.vmem [#allocation5], %s2487
          %2490 = dma.done %s2485, 49152
        $region44: #{tpu_custom_call.1} parent=39 // pred_fallthru
          _
      $region40: #{tpu_custom_call.1} parent=5 // pred_fallthru
        _
    $region6: #{tpu_custom_call.1} parent=1 // loop_footer
      %s16 = sadd.s32 1, %s12
    $region7: #{tpu_custom_call.1} parent=1 // loop_footer_branch
      %11 = sbr.rel target = $region3
    $region8: #{tpu_custom_call.1} parent=1 // loop_exit
      _
    %2491 = vsyncpa [#allocation3], 1
    %s2492 = scalar_lea.sflag [#allocation3], 1
    %2493 = vsyncpa %s2492, 1
    %2494 = vsyncpa [#allocation4], 1
    %s2495 = scalar_lea.sflag [#allocation4], 1
    %2496 = vsyncpa %s2495, 1

</llo_original>
